<compile_context>
chip_gen: v5e
topology: v5e:2x2
jax: 0.10.0
libtpu: 0.0.40
codegen_flags: <defaults>
</compile_context>

<pallas_src>
import functools

import numpy as np

import jax
import jax.numpy as jnp
from jax.experimental import pallas as pl
from jax.experimental.pallas import tpu as pltpu


# ----------------------------------------------------------------------------
# small helpers
# ----------------------------------------------------------------------------
def _round_up(x, m):
    return (x + m - 1) // m * m


def _pad2d(w, rows, cols):
    return jnp.zeros((rows, cols), jnp.float32).at[: w.shape[0], : w.shape[1]].set(w)


def _const_spec(arr):
    """Full-array block, same block for every grid step (stays VMEM-resident)."""
    nd = arr.ndim
    return pl.BlockSpec(arr.shape, lambda b, t, _nd=nd: (0,) * _nd)


# weight-stack / bias-stack indices (all padded to (P, P) / (1, P))
(_WI1, _WI2, _WI3,
 _WF1S, _WF1N, _WF2, _WF3,
 _WG1X, _WG1M, _WG2, _WG3,
 _WR1, _WR2, _WR3) = range(14)
(_BI1, _BI2, _BI3,
 _BF1, _BF2, _BF3,
 _BG1, _BG2, _BG3,
 _BR1, _BR2, _BR3) = range(12)


# ----------------------------------------------------------------------------
# Fused Pallas kernel: whole per-iteration pipeline, state resident in VMEM
# grid = (batch, iters); one batch element per "parallel" grid slice.
# ----------------------------------------------------------------------------
def _rrn_fused_kernel(emb_ref, gself_ref, gnbr_ref, scat_ref,
                      w_ref, b_ref, wih_ref, whh_ref, blstm_ref, c0_ref,
                      out_ref, x_sc, h_sc, c_sc):
    P = x_sc.shape[-1]

    def dot(a, b):
        return jnp.dot(a.astype(jnp.bfloat16), b.astype(jnp.bfloat16),
                       preferred_element_type=jnp.float32)

    def lin(x, wi, bi):
        return dot(x, w_ref[wi]) + b_ref[bi]

    # -- first iteration of this batch slice: input MLP + seed recurrent state
    @pl.when(pl.program_id(1) == 0)
    def _init():
        e = emb_ref[...]
        h1 = jnp.maximum(lin(e, _WI1, _BI1), 0.0)
        h2 = jnp.maximum(lin(h1, _WI2, _BI2), 0.0)
        x = lin(h2, _WI3, _BI3)
        x_sc[...] = x
        h_sc[...] = x            # H = X.clone().detach()
        c_sc[...] = c0_ref[...]  # g_lstm_c

    X = x_sc[...]
    H = h_sc[...]
    C = c_sc[...]

    # -- message passing: f-MLP over all (node, neighbor) pairs ----------------
    # first layer split into self / neighbor halves (each computed once per node);
    # the pair expansion and the neighbor sum are one-hot matmuls on the MXU,
    # so the (node, neighbor, 2H) tensor never exists in HBM.
    a_self = dot(H, w_ref[_WF1S]) + b_ref[_BF1]                     # (N, P)
    a_nbr = dot(H, w_ref[_WF1N])                                    # (N, P)
    pre = dot(gself_ref[...], a_self) + dot(gnbr_ref[...], a_nbr)   # (NE, P)
    h1 = jnp.maximum(pre, 0.0)
    h2 = jnp.maximum(lin(h1, _WF2, _BF2), 0.0)
    y = lin(h2, _WF3, _BF3)                                         # (NE, P)
    M = dot(scat_ref[...], y)                                       # (N, P): sum over edges

    # -- g MLP, first layer split so cat([X, M]) never materializes ------------
    g1 = jnp.maximum(dot(X, w_ref[_WG1X]) + dot(M, w_ref[_WG1M]) + b_ref[_BG1], 0.0)
    g2 = jnp.maximum(lin(g1, _WG2, _BG2), 0.0)
    g_out = lin(g2, _WG3, _BG3)                                     # (N, P)

    # -- LSTM cell (PyTorch gate order i, f, g, o; every gate slice lane-aligned)
    gates = dot(g_out, wih_ref[...]) + dot(H, whh_ref[...]) + blstm_ref[...]  # (N, 4P)
    i_g = jax.nn.sigmoid(gates[:, 0 * P:1 * P])
    f_g = jax.nn.sigmoid(gates[:, 1 * P:2 * P])
    g_g = jnp.tanh(gates[:, 2 * P:3 * P])
    o_g = jax.nn.sigmoid(gates[:, 3 * P:4 * P])
    c_new = f_g * C + i_g * g_g
    h_new = o_g * jnp.tanh(c_new)
    h_sc[...] = h_new
    c_sc[...] = c_new

    # -- r MLP -> per-iteration output (lane-dense, 128-wide) ------------------
    r1 = jnp.maximum(lin(h_new, _WR1, _BR1), 0.0)
    r2 = jnp.maximum(lin(r1, _WR2, _BR2), 0.0)
    out = lin(r2, _WR3, _BR3)                                       # (N, P)
    out_ref[...] = out.reshape(1, *out.shape)


# ----------------------------------------------------------------------------
# Static graph / operator construction (plain numpy, baked into one-hot matmuls)
# ----------------------------------------------------------------------------
def determine_edges(dim_x, dim_y):
    """Standard sudoku constraint graph: same row / column / box, excluding self."""
    md = dim_x * dim_y
    N = md * md
    edges = []
    for n in range(N):
        r, c = divmod(n, md)
        nbrs = set()
        for k in range(md):
            nbrs.add(r * md + k)          # row
            nbrs.add(k * md + c)          # column
        br, bc = (r // dim_y) * dim_y, (c // dim_x) * dim_x
        for rr in range(br, br + dim_y):  # box
            for cc in range(bc, bc + dim_x):
                nbrs.add(rr * md + cc)
        nbrs.discard(n)
        edges.append(sorted(nbrs))
    return np.asarray(edges, dtype=np.int32)


def build_message_operators(edges, N_pad, NE_pad):
    """One-hot gather / scatter operators so the neighbor gather and the
    neighbor-sum run as MXU matmuls inside the kernel (per batch element)."""
    N, E = edges.shape
    gself = np.zeros((NE_pad, N_pad), np.float32)
    gnbr = np.zeros((NE_pad, N_pad), np.float32)
    scat = np.zeros((N_pad, NE_pad), np.float32)
    p = 0
    for n in range(N):
        for e in range(E):
            gself[p, n] = 1.0
            gnbr[p, int(edges[n, e])] = 1.0
            scat[n, p] = 1.0                   # padded pair rows stay zero -> masked out
            p += 1
    return (jnp.asarray(gself, jnp.bfloat16),
            jnp.asarray(gnbr, jnp.bfloat16),
            jnp.asarray(scat, jnp.bfloat16))


# ----------------------------------------------------------------------------
# Parameter init (padded to P=128 lanes, matmul weights in bf16)
# ----------------------------------------------------------------------------
def init_embed_rrn_params(key, dim_x, dim_y, embed_size, hidden, P=128):
    max_digit = dim_x * dim_y
    keys = jax.random.split(key, 7)

    def lin_init(k, din, dout):
        kw, kb = jax.random.split(k)
        w = 0.1 * jax.random.normal(kw, (din, dout), jnp.float32)
        b = 0.1 * jax.random.normal(kb, (dout,), jnp.float32)
        return w, b

    def mlp_init(k, dims):
        ks = jax.random.split(k, 3)
        return [lin_init(kk, di, do) for kk, di, do in zip(ks, dims[:-1], dims[1:])]

    embed_table = 0.1 * jax.random.normal(keys[0], (max_digit + 1, embed_size), jnp.float32)

    i_mlp = mlp_init(keys[1], [embed_size, hidden, hidden, hidden])
    f_mlp = mlp_init(keys[2], [2 * hidden, hidden, hidden, hidden])
    g_mlp = mlp_init(keys[3], [2 * hidden, hidden, hidden, hidden])
    r_mlp = mlp_init(keys[4], [hidden, hidden, hidden, embed_size])

    (wi1, bi1), (wi2, bi2), (wi3, bi3) = i_mlp
    (wf1, bf1), (wf2, bf2), (wf3, bf3) = f_mlp
    (wg1, bg1), (wg2, bg2), (wg3, bg3) = g_mlp
    (wr1, br1), (wr2, br2), (wr3, br3) = r_mlp

    # split the concat first layers: cat(a, b) @ W1 == a @ W1[:H] + b @ W1[H:]
    wf1s, wf1n = wf1[:hidden], wf1[hidden:]
    wg1x, wg1m = wg1[:hidden], wg1[hidden:]

    w_list = [wi1, wi2, wi3, wf1s, wf1n, wf2, wf3, wg1x, wg1m, wg2, wg3, wr1, wr2, wr3]
    b_list = [bi1, bi2, bi3, bf1, bf2, bf3, bg1, bg2, bg3, br1, br2, br3]

    w_stack = jnp.stack([_pad2d(w, P, P) for w in w_list]).astype(jnp.bfloat16)   # (14,P,P)
    b_stack = jnp.stack([_pad2d(b[None, :], 1, P) for b in b_list])               # (12,1,P) f32

    # LSTM (PyTorch nn.LSTM, 1 layer; gate order i,f,g,o). Stored transposed for x @ W,
    # b_ih + b_hh folded (zeros here). Each gate padded into its own 128-lane block.
    wih = 0.1 * jax.random.normal(keys[5], (hidden, 4 * hidden), jnp.float32)
    whh = 0.1 * jax.random.normal(keys[6], (hidden, 4 * hidden), jnp.float32)

    def pad_lstm(w):
        wp = jnp.zeros((P, 4 * P), jnp.float32)
        for k in range(4):
            wp = wp.at[:hidden, k * P:k * P + hidden].set(w[:, k * hidden:(k + 1) * hidden])
        return wp.astype(jnp.bfloat16)

    return dict(
        embed_table=_pad2d(embed_table, max_digit + 1, P),   # (max_digit+1, P) f32
        w_stack=w_stack,
        b_stack=b_stack,
        wih=pad_lstm(wih),
        whh=pad_lstm(whh),
        blstm=jnp.zeros((1, 4 * P), jnp.float32),
    )


# ----------------------------------------------------------------------------
# Forward pass: one fused pallas_call over grid = (batch, iters)
# ----------------------------------------------------------------------------
@functools.partial(jax.jit, static_argnames=("iters", "embed_size"))
def embed_rrn_forward(grids, params, gself, gnbr, scat, c0, *, iters, embed_size):
    B, N = grids.shape
    hidden = c0.shape[-1]
    P = params["w_stack"].shape[-1]
    N_pad = gself.shape[1]
    R_pad = B * N_pad

    # embedding lookup (data-dependent gather) -- plain-JAX glue before the kernel
    emb = params["embed_table"][grids]                                  # (B, N, P)
    emb = jnp.pad(emb, ((0, 0), (0, N_pad - N), (0, 0))).reshape(R_pad, P)
    c0_p = jnp.pad(c0, ((0, 0), (0, N_pad - N), (0, P - hidden))).reshape(R_pad, P)

    out = pl.pallas_call(
        _rrn_fused_kernel,
        out_shape=jax.ShapeDtypeStruct((iters, R_pad, P), jnp.float32),
        grid=(B, iters),
        in_specs=[
            pl.BlockSpec((N_pad, P), lambda b, t: (b, 0)),              # emb (per batch)
            _const_spec(gself), _const_spec(gnbr), _const_spec(scat),   # message operators
            _const_spec(params["w_stack"]), _const_spec(params["b_stack"]),
            _const_spec(params["wih"]), _const_spec(params["whh"]),
            _const_spec(params["blstm"]),
            pl.BlockSpec((N_pad, P), lambda b, t: (b, 0)),              # c0 (per batch)
        ],
        out_specs=pl.BlockSpec((1, N_pad, P), lambda b, t: (t, b, 0)),
        scratch_shapes=[pltpu.VMEM((N_pad, P), jnp.float32)] * 3,       # X, H, c
        compiler_params=pltpu.CompilerParams(
            dimension_semantics=("parallel", "arbitrary")),
    )(emb, gself, gnbr, scat, params["w_stack"], params["b_stack"],
      params["wih"], params["whh"], params["blstm"], c0_p)

    out = out.reshape(iters, B, N_pad, P)[:, :, :N, :embed_size]
    return out


# ----------------------------------------------------------------------------
# Demo
# ----------------------------------------------------------------------------
if __name__ == "__main__":
    # Small config: 4x4 sudoku (dim_x=dim_y=2) -> 16 nodes, 7 neighbors per node.
    dim_x, dim_y = 2, 2
    embed_size = 16
    hidden = 32
    batch = 2
    iters = 2
    P = 128

    max_digit = dim_x * dim_y
    num_nodes = max_digit * max_digit

    edges = determine_edges(dim_x, dim_y)                       # np (16, 7)
    N_pad = _round_up(num_nodes, 8)
    NE_pad = _round_up(num_nodes * edges.shape[1], 8)
    gself, gnbr, scat = build_message_operators(edges, N_pad, NE_pad)

    key = jax.random.PRNGKey(0)
    k_params, k_grid, k_c0 = jax.random.split(key, 3)

    params = init_embed_rrn_params(k_params, dim_x, dim_y, embed_size, hidden, P=P)

    grids = jax.random.randint(k_grid, (batch, num_nodes), 0, max_digit + 1,
                               dtype=jnp.int32)                 # (2, 16)
    c0 = jax.random.normal(k_c0, (batch, num_nodes, hidden), jnp.float32)

    outputs = embed_rrn_forward(grids, params, gself, gnbr, scat, c0,
                                iters=iters, embed_size=embed_size)
    outputs = jax.block_until_ready(outputs)

    assert outputs.shape == (iters, batch, num_nodes, embed_size)
    assert bool(jnp.all(jnp.isfinite(outputs)))
    print("KERNEL_OK")
</pallas_src>

<mosaic_0001>
module attributes {stable_mosaic.version = 11 : i64} {
  func.func @_rrn_fused_kernel(%arg0: i32, %arg1: i32, %arg2: memref<16x128xf32, #tpu.memory_space<vmem>>, %arg3: memref<112x16xbf16, #tpu.memory_space<vmem>>, %arg4: memref<112x16xbf16, #tpu.memory_space<vmem>>, %arg5: memref<16x112xbf16, #tpu.memory_space<vmem>>, %arg6: memref<14x128x128xbf16, #tpu.memory_space<vmem>>, %arg7: memref<12x1x128xf32, #tpu.memory_space<vmem>>, %arg8: memref<128x512xbf16, #tpu.memory_space<vmem>>, %arg9: memref<128x512xbf16, #tpu.memory_space<vmem>>, %arg10: memref<1x512xf32, #tpu.memory_space<vmem>>, %arg11: memref<16x128xf32, #tpu.memory_space<vmem>>, %arg12: memref<1x16x128xf32, #tpu.memory_space<vmem>>, %arg13: memref<16x128xf32, #tpu.memory_space<vmem>>, %arg14: memref<16x128xf32, #tpu.memory_space<vmem>>, %arg15: memref<16x128xf32, #tpu.memory_space<vmem>>) attributes {dimension_semantics = [#tpu.dimension_semantics<parallel>, #tpu.dimension_semantics<arbitrary>], iteration_bounds = array<i64: 2, 2>, scalar_prefetch = 0 : i64, scratch_operands = 3 : i64, tpu.core_type = #tpu.core_type<tc>, window_params = [{transform_indices = @transform_0, window_bounds = array<i64: 16, 128>}, {pipeline_mode = #tpu.pipeline_mode<synchronous>, transform_indices = @transform_1, window_bounds = array<i64: 112, 16>}, {pipeline_mode = #tpu.pipeline_mode<synchronous>, transform_indices = @transform_2, window_bounds = array<i64: 112, 16>}, {pipeline_mode = #tpu.pipeline_mode<synchronous>, transform_indices = @transform_3, window_bounds = array<i64: 16, 112>}, {pipeline_mode = #tpu.pipeline_mode<synchronous>, transform_indices = @transform_4, window_bounds = array<i64: 14, 128, 128>}, {pipeline_mode = #tpu.pipeline_mode<synchronous>, transform_indices = @transform_5, window_bounds = array<i64: 12, 1, 128>}, {pipeline_mode = #tpu.pipeline_mode<synchronous>, transform_indices = @transform_6, window_bounds = array<i64: 128, 512>}, {pipeline_mode = #tpu.pipeline_mode<synchronous>, transform_indices = @transform_7, window_bounds = array<i64: 128, 512>}, {pipeline_mode = #tpu.pipeline_mode<synchronous>, transform_indices = @transform_8, window_bounds = array<i64: 1, 512>}, {transform_indices = @transform_9, window_bounds = array<i64: 16, 128>}, {transform_indices = @transform_10, window_bounds = array<i64: 1, 16, 128>}]} {
    %c0_i32 = arith.constant 0 : i32
    %0 = arith.cmpi eq, %arg1, %c0_i32 : i32
    %1 = arith.extui %0 : i1 to i32
    %c0_i32_0 = arith.constant 0 : i32
    %2 = arith.cmpi ne, %1, %c0_i32_0 : i32
    scf.if %2 {
      %c0_98 = arith.constant 0 : index
      %c0_99 = arith.constant 0 : index
      %148 = vector.load %arg2[%c0_98, %c0_99] : memref<16x128xf32, #tpu.memory_space<vmem>>, vector<16x128xf32>
      %c0_100 = arith.constant 0 : index
      %c0_101 = arith.constant 0 : index
      %c0_102 = arith.constant 0 : index
      %149 = vector.load %arg6[%c0_100, %c0_101, %c0_102] : memref<14x128x128xbf16, #tpu.memory_space<vmem>>, vector<1x128x128xbf16>
      %150 = vector.shape_cast %149 : vector<1x128x128xbf16> to vector<128x128xbf16>
      %151 = arith.truncf %148 : vector<16x128xf32> to vector<16x128xbf16>
      %cst_103 = arith.constant dense<0.000000e+00> : vector<16x128xf32>
      %152 = tpu.matmul %151, %150, %cst_103 {dimension_numbers = #tpu.dot_dimension_numbers<[1], [0], [0], [1], [0, 0, 1, 1], [], []>} : vector<16x128xbf16>, vector<128x128xbf16>, vector<16x128xf32> -> vector<16x128xf32>
      %c0_104 = arith.constant 0 : index
      %c0_105 = arith.constant 0 : index
      %c0_106 = arith.constant 0 : index
      %153 = vector.load %arg7[%c0_104, %c0_105, %c0_106] : memref<12x1x128xf32, #tpu.memory_space<vmem>>, vector<1x1x128xf32>
      %154 = vector.shape_cast %153 : vector<1x1x128xf32> to vector<1x128xf32>
      %155 = vector.broadcast %154 : vector<1x128xf32> to vector<16x128xf32>
      %156 = arith.addf %152, %155 : vector<16x128xf32>
      %cst_107 = arith.constant 0.000000e+00 : f32
      %157 = vector.broadcast %cst_107 : f32 to vector<16x128xf32>
      %158 = arith.maximumf %156, %157 : vector<16x128xf32>
      %c1 = arith.constant 1 : index
      %c0_108 = arith.constant 0 : index
      %c0_109 = arith.constant 0 : index
      %159 = vector.load %arg6[%c1, %c0_108, %c0_109] : memref<14x128x128xbf16, #tpu.memory_space<vmem>>, vector<1x128x128xbf16>
      %160 = vector.shape_cast %159 : vector<1x128x128xbf16> to vector<128x128xbf16>
      %161 = arith.truncf %158 : vector<16x128xf32> to vector<16x128xbf16>
      %cst_110 = arith.constant dense<0.000000e+00> : vector<16x128xf32>
      %162 = tpu.matmul %161, %160, %cst_110 {dimension_numbers = #tpu.dot_dimension_numbers<[1], [0], [0], [1], [0, 0, 1, 1], [], []>} : vector<16x128xbf16>, vector<128x128xbf16>, vector<16x128xf32> -> vector<16x128xf32>
      %c1_111 = arith.constant 1 : index
      %c0_112 = arith.constant 0 : index
      %c0_113 = arith.constant 0 : index
      %163 = vector.load %arg7[%c1_111, %c0_112, %c0_113] : memref<12x1x128xf32, #tpu.memory_space<vmem>>, vector<1x1x128xf32>
      %164 = vector.shape_cast %163 : vector<1x1x128xf32> to vector<1x128xf32>
      %165 = vector.broadcast %164 : vector<1x128xf32> to vector<16x128xf32>
      %166 = arith.addf %162, %165 : vector<16x128xf32>
      %cst_114 = arith.constant 0.000000e+00 : f32
      %167 = vector.broadcast %cst_114 : f32 to vector<16x128xf32>
      %168 = arith.maximumf %166, %167 : vector<16x128xf32>
      %c2 = arith.constant 2 : index
      %c0_115 = arith.constant 0 : index
      %c0_116 = arith.constant 0 : index
      %169 = vector.load %arg6[%c2, %c0_115, %c0_116] : memref<14x128x128xbf16, #tpu.memory_space<vmem>>, vector<1x128x128xbf16>
      %170 = vector.shape_cast %169 : vector<1x128x128xbf16> to vector<128x128xbf16>
      %171 = arith.truncf %168 : vector<16x128xf32> to vector<16x128xbf16>
      %cst_117 = arith.constant dense<0.000000e+00> : vector<16x128xf32>
      %172 = tpu.matmul %171, %170, %cst_117 {dimension_numbers = #tpu.dot_dimension_numbers<[1], [0], [0], [1], [0, 0, 1, 1], [], []>} : vector<16x128xbf16>, vector<128x128xbf16>, vector<16x128xf32> -> vector<16x128xf32>
      %c2_118 = arith.constant 2 : index
      %c0_119 = arith.constant 0 : index
      %c0_120 = arith.constant 0 : index
      %173 = vector.load %arg7[%c2_118, %c0_119, %c0_120] : memref<12x1x128xf32, #tpu.memory_space<vmem>>, vector<1x1x128xf32>
      %174 = vector.shape_cast %173 : vector<1x1x128xf32> to vector<1x128xf32>
      %175 = vector.broadcast %174 : vector<1x128xf32> to vector<16x128xf32>
      %176 = arith.addf %172, %175 : vector<16x128xf32>
      %c0_121 = arith.constant 0 : index
      %c0_122 = arith.constant 0 : index
      %177 = vector.load %arg13[%c0_121, %c0_122] : memref<16x128xf32, #tpu.memory_space<vmem>>, vector<16x128xf32>
      tpu.vector_store %arg13[%c0_121, %c0_122], %176 {strides = array<i32>} : memref<16x128xf32, #tpu.memory_space<vmem>>, vector<16x128xf32>,
      %c0_123 = arith.constant 0 : index
      %c0_124 = arith.constant 0 : index
      %178 = vector.load %arg14[%c0_123, %c0_124] : memref<16x128xf32, #tpu.memory_space<vmem>>, vector<16x128xf32>
      tpu.vector_store %arg14[%c0_123, %c0_124], %176 {strides = array<i32>} : memref<16x128xf32, #tpu.memory_space<vmem>>, vector<16x128xf32>,
      %c0_125 = arith.constant 0 : index
      %c0_126 = arith.constant 0 : index
      %179 = vector.load %arg11[%c0_125, %c0_126] : memref<16x128xf32, #tpu.memory_space<vmem>>, vector<16x128xf32>
      %c0_127 = arith.constant 0 : index
      %c0_128 = arith.constant 0 : index
      %180 = vector.load %arg15[%c0_127, %c0_128] : memref<16x128xf32, #tpu.memory_space<vmem>>, vector<16x128xf32>
      tpu.vector_store %arg15[%c0_127, %c0_128], %179 {strides = array<i32>} : memref<16x128xf32, #tpu.memory_space<vmem>>, vector<16x128xf32>,
    } else {
    }
    %c0 = arith.constant 0 : index
    %c0_1 = arith.constant 0 : index
    %3 = vector.load %arg13[%c0, %c0_1] : memref<16x128xf32, #tpu.memory_space<vmem>>, vector<16x128xf32>
    %c0_2 = arith.constant 0 : index
    %c0_3 = arith.constant 0 : index
    %4 = vector.load %arg14[%c0_2, %c0_3] : memref<16x128xf32, #tpu.memory_space<vmem>>, vector<16x128xf32>
    %c0_4 = arith.constant 0 : index
    %c0_5 = arith.constant 0 : index
    %5 = vector.load %arg15[%c0_4, %c0_5] : memref<16x128xf32, #tpu.memory_space<vmem>>, vector<16x128xf32>
    %c3 = arith.constant 3 : index
    %c0_6 = arith.constant 0 : index
    %c0_7 = arith.constant 0 : index
    %6 = vector.load %arg6[%c3, %c0_6, %c0_7] : memref<14x128x128xbf16, #tpu.memory_space<vmem>>, vector<1x128x128xbf16>
    %7 = vector.shape_cast %6 : vector<1x128x128xbf16> to vector<128x128xbf16>
    %8 = arith.truncf %4 : vector<16x128xf32> to vector<16x128xbf16>
    %cst = arith.constant dense<0.000000e+00> : vector<16x128xf32>
    %9 = tpu.matmul %8, %7, %cst {dimension_numbers = #tpu.dot_dimension_numbers<[1], [0], [0], [1], [0, 0, 1, 1], [], []>} : vector<16x128xbf16>, vector<128x128xbf16>, vector<16x128xf32> -> vector<16x128xf32>
    %c3_8 = arith.constant 3 : index
    %c0_9 = arith.constant 0 : index
    %c0_10 = arith.constant 0 : index
    %10 = vector.load %arg7[%c3_8, %c0_9, %c0_10] : memref<12x1x128xf32, #tpu.memory_space<vmem>>, vector<1x1x128xf32>
    %11 = vector.shape_cast %10 : vector<1x1x128xf32> to vector<1x128xf32>
    %12 = vector.broadcast %11 : vector<1x128xf32> to vector<16x128xf32>
    %13 = arith.addf %9, %12 : vector<16x128xf32>
    %c4 = arith.constant 4 : index
    %c0_11 = arith.constant 0 : index
    %c0_12 = arith.constant 0 : index
    %14 = vector.load %arg6[%c4, %c0_11, %c0_12] : memref<14x128x128xbf16, #tpu.memory_space<vmem>>, vector<1x128x128xbf16>
    %15 = vector.shape_cast %14 : vector<1x128x128xbf16> to vector<128x128xbf16>
    %16 = arith.truncf %4 : vector<16x128xf32> to vector<16x128xbf16>
    %cst_13 = arith.constant dense<0.000000e+00> : vector<16x128xf32>
    %17 = tpu.matmul %16, %15, %cst_13 {dimension_numbers = #tpu.dot_dimension_numbers<[1], [0], [0], [1], [0, 0, 1, 1], [], []>} : vector<16x128xbf16>, vector<128x128xbf16>, vector<16x128xf32> -> vector<16x128xf32>
    %c0_14 = arith.constant 0 : index
    %c0_15 = arith.constant 0 : index
    %18 = vector.load %arg3[%c0_14, %c0_15] : memref<112x16xbf16, #tpu.memory_space<vmem>>, vector<112x16xbf16>
    %19 = arith.truncf %13 : vector<16x128xf32> to vector<16x128xbf16>
    %cst_16 = arith.constant dense<0.000000e+00> : vector<112x128xf32>
    %20 = tpu.matmul %18, %19, %cst_16 {dimension_numbers = #tpu.dot_dimension_numbers<[1], [0], [0], [1], [0, 0, 1, 1], [], []>} : vector<112x16xbf16>, vector<16x128xbf16>, vector<112x128xf32> -> vector<112x128xf32>
    %c0_17 = arith.constant 0 : index
    %c0_18 = arith.constant 0 : index
    %21 = vector.load %arg4[%c0_17, %c0_18] : memref<112x16xbf16, #tpu.memory_space<vmem>>, vector<112x16xbf16>
    %22 = arith.truncf %17 : vector<16x128xf32> to vector<16x128xbf16>
    %cst_19 = arith.constant dense<0.000000e+00> : vector<112x128xf32>
    %23 = tpu.matmul %21, %22, %cst_19 {dimension_numbers = #tpu.dot_dimension_numbers<[1], [0], [0], [1], [0, 0, 1, 1], [], []>} : vector<112x16xbf16>, vector<16x128xbf16>, vector<112x128xf32> -> vector<112x128xf32>
    %24 = arith.addf %20, %23 : vector<112x128xf32>
    %cst_20 = arith.constant 0.000000e+00 : f32
    %25 = vector.broadcast %cst_20 : f32 to vector<112x128xf32>
    %26 = arith.maximumf %24, %25 : vector<112x128xf32>
    %c5 = arith.constant 5 : index
    %c0_21 = arith.constant 0 : index
    %c0_22 = arith.constant 0 : index
    %27 = vector.load %arg6[%c5, %c0_21, %c0_22] : memref<14x128x128xbf16, #tpu.memory_space<vmem>>, vector<1x128x128xbf16>
    %28 = vector.shape_cast %27 : vector<1x128x128xbf16> to vector<128x128xbf16>
    %29 = arith.truncf %26 : vector<112x128xf32> to vector<112x128xbf16>
    %cst_23 = arith.constant dense<0.000000e+00> : vector<112x128xf32>
    %30 = tpu.matmul %29, %28, %cst_23 {dimension_numbers = #tpu.dot_dimension_numbers<[1], [0], [0], [1], [0, 0, 1, 1], [], []>} : vector<112x128xbf16>, vector<128x128xbf16>, vector<112x128xf32> -> vector<112x128xf32>
    %c4_24 = arith.constant 4 : index
    %c0_25 = arith.constant 0 : index
    %c0_26 = arith.constant 0 : index
    %31 = vector.load %arg7[%c4_24, %c0_25, %c0_26] : memref<12x1x128xf32, #tpu.memory_space<vmem>>, vector<1x1x128xf32>
    %32 = vector.shape_cast %31 : vector<1x1x128xf32> to vector<1x128xf32>
    %33 = vector.broadcast %32 : vector<1x128xf32> to vector<112x128xf32>
    %34 = arith.addf %30, %33 : vector<112x128xf32>
    %cst_27 = arith.constant 0.000000e+00 : f32
    %35 = vector.broadcast %cst_27 : f32 to vector<112x128xf32>
    %36 = arith.maximumf %34, %35 : vector<112x128xf32>
    %c6 = arith.constant 6 : index
    %c0_28 = arith.constant 0 : index
    %c0_29 = arith.constant 0 : index
    %37 = vector.load %arg6[%c6, %c0_28, %c0_29] : memref<14x128x128xbf16, #tpu.memory_space<vmem>>, vector<1x128x128xbf16>
    %38 = vector.shape_cast %37 : vector<1x128x128xbf16> to vector<128x128xbf16>
    %39 = arith.truncf %36 : vector<112x128xf32> to vector<112x128xbf16>
    %cst_30 = arith.constant dense<0.000000e+00> : vector<112x128xf32>
    %40 = tpu.matmul %39, %38, %cst_30 {dimension_numbers = #tpu.dot_dimension_numbers<[1], [0], [0], [1], [0, 0, 1, 1], [], []>} : vector<112x128xbf16>, vector<128x128xbf16>, vector<112x128xf32> -> vector<112x128xf32>
    %c5_31 = arith.constant 5 : index
    %c0_32 = arith.constant 0 : index
    %c0_33 = arith.constant 0 : index
    %41 = vector.load %arg7[%c5_31, %c0_32, %c0_33] : memref<12x1x128xf32, #tpu.memory_space<vmem>>, vector<1x1x128xf32>
    %42 = vector.shape_cast %41 : vector<1x1x128xf32> to vector<1x128xf32>
    %43 = vector.broadcast %42 : vector<1x128xf32> to vector<112x128xf32>
    %44 = arith.addf %40, %43 : vector<112x128xf32>
    %c0_34 = arith.constant 0 : index
    %c0_35 = arith.constant 0 : index
    %45 = vector.load %arg5[%c0_34, %c0_35] : memref<16x112xbf16, #tpu.memory_space<vmem>>, vector<16x112xbf16>
    %46 = arith.truncf %44 : vector<112x128xf32> to vector<112x128xbf16>
    %cst_36 = arith.constant dense<0.000000e+00> : vector<16x128xf32>
    %47 = tpu.matmul %45, %46, %cst_36 {dimension_numbers = #tpu.dot_dimension_numbers<[1], [0], [0], [1], [0, 0, 1, 1], [], []>} : vector<16x112xbf16>, vector<112x128xbf16>, vector<16x128xf32> -> vector<16x128xf32>
    %c7 = arith.constant 7 : index
    %c0_37 = arith.constant 0 : index
    %c0_38 = arith.constant 0 : index
    %48 = vector.load %arg6[%c7, %c0_37, %c0_38] : memref<14x128x128xbf16, #tpu.memory_space<vmem>>, vector<1x128x128xbf16>
    %49 = vector.shape_cast %48 : vector<1x128x128xbf16> to vector<128x128xbf16>
    %50 = arith.truncf %3 : vector<16x128xf32> to vector<16x128xbf16>
    %cst_39 = arith.constant dense<0.000000e+00> : vector<16x128xf32>
    %51 = tpu.matmul %50, %49, %cst_39 {dimension_numbers = #tpu.dot_dimension_numbers<[1], [0], [0], [1], [0, 0, 1, 1], [], []>} : vector<16x128xbf16>, vector<128x128xbf16>, vector<16x128xf32> -> vector<16x128xf32>
    %c8 = arith.constant 8 : index
    %c0_40 = arith.constant 0 : index
    %c0_41 = arith.constant 0 : index
    %52 = vector.load %arg6[%c8, %c0_40, %c0_41] : memref<14x128x128xbf16, #tpu.memory_space<vmem>>, vector<1x128x128xbf16>
    %53 = vector.shape_cast %52 : vector<1x128x128xbf16> to vector<128x128xbf16>
    %54 = arith.truncf %47 : vector<16x128xf32> to vector<16x128xbf16>
    %cst_42 = arith.constant dense<0.000000e+00> : vector<16x128xf32>
    %55 = tpu.matmul %54, %53, %cst_42 {dimension_numbers = #tpu.dot_dimension_numbers<[1], [0], [0], [1], [0, 0, 1, 1], [], []>} : vector<16x128xbf16>, vector<128x128xbf16>, vector<16x128xf32> -> vector<16x128xf32>
    %56 = arith.addf %51, %55 : vector<16x128xf32>
    %c6_43 = arith.constant 6 : index
    %c0_44 = arith.constant 0 : index
    %c0_45 = arith.constant 0 : index
    %57 = vector.load %arg7[%c6_43, %c0_44, %c0_45] : memref<12x1x128xf32, #tpu.memory_space<vmem>>, vector<1x1x128xf32>
    %58 = vector.shape_cast %57 : vector<1x1x128xf32> to vector<1x128xf32>
    %59 = vector.broadcast %58 : vector<1x128xf32> to vector<16x128xf32>
    %60 = arith.addf %56, %59 : vector<16x128xf32>
    %cst_46 = arith.constant 0.000000e+00 : f32
    %61 = vector.broadcast %cst_46 : f32 to vector<16x128xf32>
    %62 = arith.maximumf %60, %61 : vector<16x128xf32>
    %c9 = arith.constant 9 : index
    %c0_47 = arith.constant 0 : index
    %c0_48 = arith.constant 0 : index
    %63 = vector.load %arg6[%c9, %c0_47, %c0_48] : memref<14x128x128xbf16, #tpu.memory_space<vmem>>, vector<1x128x128xbf16>
    %64 = vector.shape_cast %63 : vector<1x128x128xbf16> to vector<128x128xbf16>
    %65 = arith.truncf %62 : vector<16x128xf32> to vector<16x128xbf16>
    %cst_49 = arith.constant dense<0.000000e+00> : vector<16x128xf32>
    %66 = tpu.matmul %65, %64, %cst_49 {dimension_numbers = #tpu.dot_dimension_numbers<[1], [0], [0], [1], [0, 0, 1, 1], [], []>} : vector<16x128xbf16>, vector<128x128xbf16>, vector<16x128xf32> -> vector<16x128xf32>
    %c7_50 = arith.constant 7 : index
    %c0_51 = arith.constant 0 : index
    %c0_52 = arith.constant 0 : index
    %67 = vector.load %arg7[%c7_50, %c0_51, %c0_52] : memref<12x1x128xf32, #tpu.memory_space<vmem>>, vector<1x1x128xf32>
    %68 = vector.shape_cast %67 : vector<1x1x128xf32> to vector<1x128xf32>
    %69 = vector.broadcast %68 : vector<1x128xf32> to vector<16x128xf32>
    %70 = arith.addf %66, %69 : vector<16x128xf32>
    %cst_53 = arith.constant 0.000000e+00 : f32
    %71 = vector.broadcast %cst_53 : f32 to vector<16x128xf32>
    %72 = arith.maximumf %70, %71 : vector<16x128xf32>
    %c10 = arith.constant 10 : index
    %c0_54 = arith.constant 0 : index
    %c0_55 = arith.constant 0 : index
    %73 = vector.load %arg6[%c10, %c0_54, %c0_55] : memref<14x128x128xbf16, #tpu.memory_space<vmem>>, vector<1x128x128xbf16>
    %74 = vector.shape_cast %73 : vector<1x128x128xbf16> to vector<128x128xbf16>
    %75 = arith.truncf %72 : vector<16x128xf32> to vector<16x128xbf16>
    %cst_56 = arith.constant dense<0.000000e+00> : vector<16x128xf32>
    %76 = tpu.matmul %75, %74, %cst_56 {dimension_numbers = #tpu.dot_dimension_numbers<[1], [0], [0], [1], [0, 0, 1, 1], [], []>} : vector<16x128xbf16>, vector<128x128xbf16>, vector<16x128xf32> -> vector<16x128xf32>
    %c8_57 = arith.constant 8 : index
    %c0_58 = arith.constant 0 : index
    %c0_59 = arith.constant 0 : index
    %77 = vector.load %arg7[%c8_57, %c0_58, %c0_59] : memref<12x1x128xf32, #tpu.memory_space<vmem>>, vector<1x1x128xf32>
    %78 = vector.shape_cast %77 : vector<1x1x128xf32> to vector<1x128xf32>
    %79 = vector.broadcast %78 : vector<1x128xf32> to vector<16x128xf32>
    %80 = arith.addf %76, %79 : vector<16x128xf32>
    %c0_60 = arith.constant 0 : index
    %c0_61 = arith.constant 0 : index
    %81 = vector.load %arg8[%c0_60, %c0_61] : memref<128x512xbf16, #tpu.memory_space<vmem>>, vector<128x512xbf16>
    %82 = arith.truncf %80 : vector<16x128xf32> to vector<16x128xbf16>
    %cst_62 = arith.constant dense<0.000000e+00> : vector<16x512xf32>
    %83 = tpu.matmul %82, %81, %cst_62 {dimension_numbers = #tpu.dot_dimension_numbers<[1], [0], [0], [1], [0, 0, 1, 1], [], []>} : vector<16x128xbf16>, vector<128x512xbf16>, vector<16x512xf32> -> vector<16x512xf32>
    %c0_63 = arith.constant 0 : index
    %c0_64 = arith.constant 0 : index
    %84 = vector.load %arg9[%c0_63, %c0_64] : memref<128x512xbf16, #tpu.memory_space<vmem>>, vector<128x512xbf16>
    %85 = arith.truncf %4 : vector<16x128xf32> to vector<16x128xbf16>
    %cst_65 = arith.constant dense<0.000000e+00> : vector<16x512xf32>
    %86 = tpu.matmul %85, %84, %cst_65 {dimension_numbers = #tpu.dot_dimension_numbers<[1], [0], [0], [1], [0, 0, 1, 1], [], []>} : vector<16x128xbf16>, vector<128x512xbf16>, vector<16x512xf32> -> vector<16x512xf32>
    %87 = arith.addf %83, %86 : vector<16x512xf32>
    %c0_66 = arith.constant 0 : index
    %c0_67 = arith.constant 0 : index
    %88 = vector.load %arg10[%c0_66, %c0_67] : memref<1x512xf32, #tpu.memory_space<vmem>>, vector<1x512xf32>
    %89 = vector.broadcast %88 : vector<1x512xf32> to vector<16x512xf32>
    %90 = arith.addf %87, %89 : vector<16x512xf32>
    %91 = vector.extract_strided_slice %90 {offsets = [0, 0], sizes = [16, 128], strides = [1, 1]} : vector<16x512xf32> to vector<16x128xf32>
    %92 = arith.negf %91 : vector<16x128xf32>
    %93 = math.exp %92 : vector<16x128xf32>
    %cst_68 = arith.constant 1.000000e+00 : f32
    %94 = vector.broadcast %cst_68 : f32 to vector<16x128xf32>
    %95 = arith.addf %94, %93 : vector<16x128xf32>
    %96 = arith.divf %94, %95 : vector<16x128xf32>
    %97 = vector.extract_strided_slice %90 {offsets = [0, 128], sizes = [16, 128], strides = [1, 1]} : vector<16x512xf32> to vector<16x128xf32>
    %98 = arith.negf %97 : vector<16x128xf32>
    %99 = math.exp %98 : vector<16x128xf32>
    %cst_69 = arith.constant 1.000000e+00 : f32
    %100 = vector.broadcast %cst_69 : f32 to vector<16x128xf32>
    %101 = arith.addf %100, %99 : vector<16x128xf32>
    %102 = arith.divf %100, %101 : vector<16x128xf32>
    %103 = vector.extract_strided_slice %90 {offsets = [0, 256], sizes = [16, 128], strides = [1, 1]} : vector<16x512xf32> to vector<16x128xf32>
    %104 = math.tanh %103 : vector<16x128xf32>
    %105 = vector.extract_strided_slice %90 {offsets = [0, 384], sizes = [16, 128], strides = [1, 1]} : vector<16x512xf32> to vector<16x128xf32>
    %106 = arith.negf %105 : vector<16x128xf32>
    %107 = math.exp %106 : vector<16x128xf32>
    %cst_70 = arith.constant 1.000000e+00 : f32
    %108 = vector.broadcast %cst_70 : f32 to vector<16x128xf32>
    %109 = arith.addf %108, %107 : vector<16x128xf32>
    %110 = arith.divf %108, %109 : vector<16x128xf32>
    %111 = arith.mulf %102, %5 : vector<16x128xf32>
    %112 = arith.mulf %96, %104 : vector<16x128xf32>
    %113 = arith.addf %111, %112 : vector<16x128xf32>
    %114 = math.tanh %113 : vector<16x128xf32>
    %115 = arith.mulf %110, %114 : vector<16x128xf32>
    %c0_71 = arith.constant 0 : index
    %c0_72 = arith.constant 0 : index
    %116 = vector.load %arg14[%c0_71, %c0_72] : memref<16x128xf32, #tpu.memory_space<vmem>>, vector<16x128xf32>
    tpu.vector_store %arg14[%c0_71, %c0_72], %115 {strides = array<i32>} : memref<16x128xf32, #tpu.memory_space<vmem>>, vector<16x128xf32>,
    %c0_73 = arith.constant 0 : index
    %c0_74 = arith.constant 0 : index
    %117 = vector.load %arg15[%c0_73, %c0_74] : memref<16x128xf32, #tpu.memory_space<vmem>>, vector<16x128xf32>
    tpu.vector_store %arg15[%c0_73, %c0_74], %113 {strides = array<i32>} : memref<16x128xf32, #tpu.memory_space<vmem>>, vector<16x128xf32>,
    %c11 = arith.constant 11 : index
    %c0_75 = arith.constant 0 : index
    %c0_76 = arith.constant 0 : index
    %118 = vector.load %arg6[%c11, %c0_75, %c0_76] : memref<14x128x128xbf16, #tpu.memory_space<vmem>>, vector<1x128x128xbf16>
    %119 = vector.shape_cast %118 : vector<1x128x128xbf16> to vector<128x128xbf16>
    %120 = arith.truncf %115 : vector<16x128xf32> to vector<16x128xbf16>
    %cst_77 = arith.constant dense<0.000000e+00> : vector<16x128xf32>
    %121 = tpu.matmul %120, %119, %cst_77 {dimension_numbers = #tpu.dot_dimension_numbers<[1], [0], [0], [1], [0, 0, 1, 1], [], []>} : vector<16x128xbf16>, vector<128x128xbf16>, vector<16x128xf32> -> vector<16x128xf32>
    %c9_78 = arith.constant 9 : index
    %c0_79 = arith.constant 0 : index
    %c0_80 = arith.constant 0 : index
    %122 = vector.load %arg7[%c9_78, %c0_79, %c0_80] : memref<12x1x128xf32, #tpu.memory_space<vmem>>, vector<1x1x128xf32>
    %123 = vector.shape_cast %122 : vector<1x1x128xf32> to vector<1x128xf32>
    %124 = vector.broadcast %123 : vector<1x128xf32> to vector<16x128xf32>
    %125 = arith.addf %121, %124 : vector<16x128xf32>
    %cst_81 = arith.constant 0.000000e+00 : f32
    %126 = vector.broadcast %cst_81 : f32 to vector<16x128xf32>
    %127 = arith.maximumf %125, %126 : vector<16x128xf32>
    %c12 = arith.constant 12 : index
    %c0_82 = arith.constant 0 : index
    %c0_83 = arith.constant 0 : index
    %128 = vector.load %arg6[%c12, %c0_82, %c0_83] : memref<14x128x128xbf16, #tpu.memory_space<vmem>>, vector<1x128x128xbf16>
    %129 = vector.shape_cast %128 : vector<1x128x128xbf16> to vector<128x128xbf16>
    %130 = arith.truncf %127 : vector<16x128xf32> to vector<16x128xbf16>
    %cst_84 = arith.constant dense<0.000000e+00> : vector<16x128xf32>
    %131 = tpu.matmul %130, %129, %cst_84 {dimension_numbers = #tpu.dot_dimension_numbers<[1], [0], [0], [1], [0, 0, 1, 1], [], []>} : vector<16x128xbf16>, vector<128x128xbf16>, vector<16x128xf32> -> vector<16x128xf32>
    %c10_85 = arith.constant 10 : index
    %c0_86 = arith.constant 0 : index
    %c0_87 = arith.constant 0 : index
    %132 = vector.load %arg7[%c10_85, %c0_86, %c0_87] : memref<12x1x128xf32, #tpu.memory_space<vmem>>, vector<1x1x128xf32>
    %133 = vector.shape_cast %132 : vector<1x1x128xf32> to vector<1x128xf32>
    %134 = vector.broadcast %133 : vector<1x128xf32> to vector<16x128xf32>
    %135 = arith.addf %131, %134 : vector<16x128xf32>
    %cst_88 = arith.constant 0.000000e+00 : f32
    %136 = vector.broadcast %cst_88 : f32 to vector<16x128xf32>
    %137 = arith.maximumf %135, %136 : vector<16x128xf32>
    %c13 = arith.constant 13 : index
    %c0_89 = arith.constant 0 : index
    %c0_90 = arith.constant 0 : index
    %138 = vector.load %arg6[%c13, %c0_89, %c0_90] : memref<14x128x128xbf16, #tpu.memory_space<vmem>>, vector<1x128x128xbf16>
    %139 = vector.shape_cast %138 : vector<1x128x128xbf16> to vector<128x128xbf16>
    %140 = arith.truncf %137 : vector<16x128xf32> to vector<16x128xbf16>
    %cst_91 = arith.constant dense<0.000000e+00> : vector<16x128xf32>
    %141 = tpu.matmul %140, %139, %cst_91 {dimension_numbers = #tpu.dot_dimension_numbers<[1], [0], [0], [1], [0, 0, 1, 1], [], []>} : vector<16x128xbf16>, vector<128x128xbf16>, vector<16x128xf32> -> vector<16x128xf32>
    %c11_92 = arith.constant 11 : index
    %c0_93 = arith.constant 0 : index
    %c0_94 = arith.constant 0 : index
    %142 = vector.load %arg7[%c11_92, %c0_93, %c0_94] : memref<12x1x128xf32, #tpu.memory_space<vmem>>, vector<1x1x128xf32>
    %143 = vector.shape_cast %142 : vector<1x1x128xf32> to vector<1x128xf32>
    %144 = vector.broadcast %143 : vector<1x128xf32> to vector<16x128xf32>
    %145 = arith.addf %141, %144 : vector<16x128xf32>
    %146 = vector.shape_cast %145 : vector<16x128xf32> to vector<1x16x128xf32>
    %c0_95 = arith.constant 0 : index
    %c0_96 = arith.constant 0 : index
    %c0_97 = arith.constant 0 : index
    %147 = vector.load %arg12[%c0_95, %c0_96, %c0_97] : memref<1x16x128xf32, #tpu.memory_space<vmem>>, vector<1x16x128xf32>
    tpu.vector_store %arg12[%c0_95, %c0_96, %c0_97], %146 {strides = array<i32>} : memref<1x16x128xf32, #tpu.memory_space<vmem>>, vector<1x16x128xf32>,
    return
  }
  func.func @transform_0(%arg0: i32, %arg1: i32) -> (i32, i32) {
    %c0_i32 = arith.constant 0 : i32
    %c0_i32_0 = arith.constant 0 : i32
    return %arg0, %c0_i32 : i32, i32
  }
  func.func @transform_1(%arg0: i32, %arg1: i32) -> (i32, i32) {
    %c0_i32 = arith.constant 0 : i32
    %c0_i32_0 = arith.constant 0 : i32
    %c0_i32_1 = arith.constant 0 : i32
    return %c0_i32, %c0_i32_0 : i32, i32
  }
  func.func @transform_2(%arg0: i32, %arg1: i32) -> (i32, i32) {
    %c0_i32 = arith.constant 0 : i32
    %c0_i32_0 = arith.constant 0 : i32
    %c0_i32_1 = arith.constant 0 : i32
    return %c0_i32, %c0_i32_0 : i32, i32
  }
  func.func @transform_3(%arg0: i32, %arg1: i32) -> (i32, i32) {
    %c0_i32 = arith.constant 0 : i32
    %c0_i32_0 = arith.constant 0 : i32
    %c0_i32_1 = arith.constant 0 : i32
    return %c0_i32, %c0_i32_0 : i32, i32
  }
  func.func @transform_4(%arg0: i32, %arg1: i32) -> (i32, i32, i32) {
    %c0_i32 = arith.constant 0 : i32
    %c0_i32_0 = arith.constant 0 : i32
    %c0_i32_1 = arith.constant 0 : i32
    %c0_i32_2 = arith.constant 0 : i32
    return %c0_i32, %c0_i32_0, %c0_i32_1 : i32, i32, i32
  }
  func.func @transform_5(%arg0: i32, %arg1: i32) -> (i32, i32, i32) {
    %c0_i32 = arith.constant 0 : i32
    %c0_i32_0 = arith.constant 0 : i32
    %c0_i32_1 = arith.constant 0 : i32
    %c0_i32_2 = arith.constant 0 : i32
    return %c0_i32, %c0_i32_0, %c0_i32_1 : i32, i32, i32
  }
  func.func @transform_6(%arg0: i32, %arg1: i32) -> (i32, i32) {
    %c0_i32 = arith.constant 0 : i32
    %c0_i32_0 = arith.constant 0 : i32
    %c0_i32_1 = arith.constant 0 : i32
    return %c0_i32, %c0_i32_0 : i32, i32
  }
  func.func @transform_7(%arg0: i32, %arg1: i32) -> (i32, i32) {
    %c0_i32 = arith.constant 0 : i32
    %c0_i32_0 = arith.constant 0 : i32
    %c0_i32_1 = arith.constant 0 : i32
    return %c0_i32, %c0_i32_0 : i32, i32
  }
  func.func @transform_8(%arg0: i32, %arg1: i32) -> (i32, i32) {
    %c0_i32 = arith.constant 0 : i32
    %c0_i32_0 = arith.constant 0 : i32
    %c0_i32_1 = arith.constant 0 : i32
    return %c0_i32, %c0_i32_0 : i32, i32
  }
  func.func @transform_9(%arg0: i32, %arg1: i32) -> (i32, i32) {
    %c0_i32 = arith.constant 0 : i32
    %c0_i32_0 = arith.constant 0 : i32
    return %arg0, %c0_i32 : i32, i32
  }
  func.func @transform_10(%arg0: i32, %arg1: i32) -> (i32, i32, i32) {
    %c0_i32 = arith.constant 0 : i32
    %c0_i32_0 = arith.constant 0 : i32
    return %arg1, %arg0, %c0_i32 : i32, i32, i32
  }
}

</mosaic_0001>

<llo_original>
// kernel: embed_rrn_forward.1
$region0: #{embed_rrn_forward.1}
  #allocation0 [shape = 'u32[]', space=smem, size = 0x4, offset = 0x4, fixed_abs, tag = 'smem constant byte address 0x4 - core index']
  #allocation1 [shape = 'u32[72,128]{1,0:T(1,128)}', space=vmem, size = 0x9000, scoped, tag = 'internal scratch']
  #allocation2 [shape = 'f32[16,128]{1,0:T(8,128)}', space=vmem, size = 0x2000, scoped, tag = 'scratch operand']
  #allocation3 [shape = 'f32[16,128]{1,0:T(8,128)}', space=vmem, size = 0x2000, scoped, tag = 'scratch operand']
  #allocation4 [shape = 'f32[16,128]{1,0:T(8,128)}', space=vmem, size = 0x2000, scoped, tag = 'scratch operand']
  %s0 = inlined_call_operand.vmem [shape: f32[32,128], index: 0, kind: input, shape index: {}]
  %s1 = inlined_call_operand.vmem [shape: bf16[112,16], index: 1, kind: input, shape index: {}]
  %s2 = inlined_call_operand.vmem [shape: bf16[112,16], index: 2, kind: input, shape index: {}]
  %s3 = inlined_call_operand.vmem [shape: bf16[16,112], index: 3, kind: input, shape index: {}]
  %s4 = inlined_call_operand.hbm [shape: bf16[14,128,128], index: 4, kind: input, shape index: {}]
  %s5 = inlined_call_operand.vmem [shape: f32[12,1,128], index: 5, kind: input, shape index: {}]
  %s6 = inlined_call_operand.vmem [shape: bf16[128,512], index: 6, kind: input, shape index: {}]
  %s7 = inlined_call_operand.hbm [shape: bf16[128,512], index: 7, kind: input, shape index: {}]
  %s8 = inlined_call_operand.vmem [shape: f32[1,512], index: 8, kind: input, shape index: {}]
  %s9 = inlined_call_operand.vmem [shape: f32[32,128], index: 9, kind: input, shape index: {}]
  %s10 = inlined_call_operand.hbm [shape: f32[2,32,128], index: 10, kind: output, shape index: {}]
  %s11 = sld [smem:[#allocation0]]
  $region85: #{embed_rrn_forward.1} parent=0
    _
  %s13 = ssub.s32 1, %s11
  %s14 = scalar_select 0, %s13, %s11
  $region1: #{embed_rrn_forward.1} parent=0
    #allocation5 [shape = 'u8[458752]{0}', space=vmem, size = 0x70000, scoped, tag = 'input window, operand 4, single buffered']
    #allocation6 [shape = 's32[2]{0}', space=sflag, size = 0x8, scoped, tag = 'scoped memory for embed_rrn_forward.1']
    #allocation7 [shape = 's32[2]{0}', space=sflag, size = 0x8, scoped, tag = 'scoped memory for embed_rrn_forward.1']
    #allocation8 [shape = 'u8[131072]{0}', space=vmem, size = 0x20000, scoped, tag = 'input window, operand 7, single buffered']
    #allocation9 [shape = 's32[1]{0}', space=sflag, size = 0x4, scoped, tag = 'scoped memory for embed_rrn_forward.1']
    #allocation10 [shape = 'u8[16384]{0}', space=vmem, size = 0x4000, scoped, tag = 'output window, operand 0']
    %15 = vsyncpa [#allocation6], 0
    %16 = vsyncpa [#allocation9], 0
    %17 = vsyncpa [#allocation7], 0
    %s18 = scalar_lea.sflag [#allocation7], 1
    %19 = vsyncpa %s18, 0
    loop: start=0, step=1, limit=6
    $region2: #{embed_rrn_forward.1} parent=1 // loop_pre_header
      _
    $region3: #{embed_rrn_forward.1} parent=1 // loop_header
      %s21 = sphi 0, %s25
      %p22 = scmp.ge.s32.totalorder %s21, 6
      %s28 = sphi 0, %s40
      %s29 = sphi 0, %s36
      %s30 = sphi 0, %s28
      %s31 = sphi 0, %s29
      %s32 = sphi 0, %s30
      %s33 = sphi 0, %s31
      %s43 = sphi 0, %s45
      %s46 = sphi 0, %s43
      %s47 = sphi 0, %s46
      %s63 = sphi 0, %s47
      %s67 = sphi 0, %s67
      %s69 = sphi 0, %s67
      %s70 = sphi 0, %s69
      %s84 = sphi 0, %s70
      %s88 = sphi 0, %s88
      %s90 = sphi 0, %s88
      %s91 = sphi 0, %s90
      %s105 = sphi 0, %s91
      %s109 = sphi 0, %s109
      %s111 = sphi 0, %s109
      %s112 = sphi 0, %s111
      %s126 = sphi 0, %s112
      %s130 = sphi 0, %s130
      %s132 = sphi 0, %s130
      %s133 = sphi 0, %s132
      %s147 = sphi 0, %s133
      %s151 = sphi 0, %s151
      %s153 = sphi 0, %s151
      %s154 = sphi 0, %s153
      %s168 = sphi 0, %s154
      %s172 = sphi 0, %s172
      %s174 = sphi 0, %s172
      %s175 = sphi 0, %s174
      %s189 = sphi 0, %s175
      %s193 = sphi 0, %s193
      %s195 = sphi 0, %s193
      %s196 = sphi 0, %s195
      %s210 = sphi 0, %s196
      %s214 = sphi 0, %s214
      %s216 = sphi 0, %s214
      %s217 = sphi 0, %s216
      %s231 = sphi 0, %s217
      %s237 = sphi 0, %s239
      %s240 = sphi 0, %s237
      %s241 = sphi 0, %s240
      %s257 = sphi 0, %s241
      %s265 = sphi 0, %s267
      %s268 = sphi 0, %s265
      %s269 = sphi 0, %s268
      %s285 = sphi 0, %s269
    $region4: #{embed_rrn_forward.1} parent=1 // loop_header_branch
      %24 = sbr.rel (%p22) target = $region8
    $region5: #{embed_rrn_forward.1} parent=1 // loop_body
      %s26 = ssub.s32 %s21, 1
      %s27 = ssub.s32 %s21, 2
      %s34 = sadd.s32 1, %s29
      %p35 = scmp.ge.s32.totalorder %s34, 2
      %s36 = scalar_select %p35, 0, %s34
      %s37 = sadd.s32 1, %s28
      %s38 = scalar_select %p35, %s37, %s28
      %p39 = scmp.ge.s32.totalorder %s38, 2
      %s40 = scalar_select %p39, 0, %s38
      %s41 = ssub.s32 %s28, %s40
      %p42 = scmp.eq.s32.totalorder %s41, 0
      %s44 = sadd.s32 %s43, 1
      %s45 = scalar_select %p42, %s43, %s44
      %p48 = pneg %p42
      %p49 = scmp.eq.s32.totalorder %s21, 3
      %p50 = por %p48, %p49
      %p51 = scmp.ne.s32.totalorder %s43, %s46
      %p52 = scmp.eq.s32.totalorder %s21, 0
      %p53 = por %p51, %p52
      %p54 = scmp.ne.s32.totalorder %s43, %s46
      %p55 = scmp.eq.s32.totalorder %s26, 3
      %p56 = por %p54, %p55
      %p57 = scmp.ne.s32.totalorder %s46, %s47
      %p58 = scmp.eq.s32.totalorder %s26, 0
      %p59 = por %p57, %p58
      %p60 = scmp.ne.s32.totalorder %s46, %s47
      %p61 = scmp.eq.s32.totalorder %s27, 3
      %p62 = por %p60, %p61
      %p64 = scmp.ne.s32.totalorder %s47, %s63
      %p65 = scmp.eq.s32.totalorder %s27, 0
      %p66 = por %p64, %p65
      %s68 = sadd.s32 %s67, 1
      %p71 = scmp.eq.s32.totalorder %s21, 3
      %p72 = scmp.ne.s32.totalorder %s67, %s69
      %p73 = scmp.eq.s32.totalorder %s21, 0
      %p74 = por %p72, %p73
      %p75 = scmp.ne.s32.totalorder %s67, %s69
      %p76 = scmp.eq.s32.totalorder %s26, 3
      %p77 = por %p75, %p76
      %p78 = scmp.ne.s32.totalorder %s69, %s70
      %p79 = scmp.eq.s32.totalorder %s26, 0
      %p80 = por %p78, %p79
      %p81 = scmp.ne.s32.totalorder %s69, %s70
      %p82 = scmp.eq.s32.totalorder %s27, 3
      %p83 = por %p81, %p82
      %p85 = scmp.ne.s32.totalorder %s70, %s84
      %p86 = scmp.eq.s32.totalorder %s27, 0
      %p87 = por %p85, %p86
      %s89 = sadd.s32 %s88, 1
      %p92 = scmp.eq.s32.totalorder %s21, 3
      %p93 = scmp.ne.s32.totalorder %s88, %s90
      %p94 = scmp.eq.s32.totalorder %s21, 0
      %p95 = por %p93, %p94
      %p96 = scmp.ne.s32.totalorder %s88, %s90
      %p97 = scmp.eq.s32.totalorder %s26, 3
      %p98 = por %p96, %p97
      %p99 = scmp.ne.s32.totalorder %s90, %s91
      %p100 = scmp.eq.s32.totalorder %s26, 0
      %p101 = por %p99, %p100
      %p102 = scmp.ne.s32.totalorder %s90, %s91
      %p103 = scmp.eq.s32.totalorder %s27, 3
      %p104 = por %p102, %p103
      %p106 = scmp.ne.s32.totalorder %s91, %s105
      %p107 = scmp.eq.s32.totalorder %s27, 0
      %p108 = por %p106, %p107
      %s110 = sadd.s32 %s109, 1
      %p113 = scmp.eq.s32.totalorder %s21, 3
      %p114 = scmp.ne.s32.totalorder %s109, %s111
      %p115 = scmp.eq.s32.totalorder %s21, 0
      %p116 = por %p114, %p115
      %p117 = scmp.ne.s32.totalorder %s109, %s111
      %p118 = scmp.eq.s32.totalorder %s26, 3
      %p119 = por %p117, %p118
      %p120 = scmp.ne.s32.totalorder %s111, %s112
      %p121 = scmp.eq.s32.totalorder %s26, 0
      %p122 = por %p120, %p121
      %p123 = scmp.ne.s32.totalorder %s111, %s112
      %p124 = scmp.eq.s32.totalorder %s27, 3
      %p125 = por %p123, %p124
      %p127 = scmp.ne.s32.totalorder %s112, %s126
      %p128 = scmp.eq.s32.totalorder %s27, 0
      %p129 = por %p127, %p128
      %s131 = sadd.s32 %s130, 1
      %p134 = scmp.eq.s32.totalorder %s21, 3
      %p135 = scmp.ne.s32.totalorder %s130, %s132
      %p136 = scmp.eq.s32.totalorder %s21, 0
      %p137 = por %p135, %p136
      %p138 = scmp.ne.s32.totalorder %s130, %s132
      %p139 = scmp.eq.s32.totalorder %s26, 3
      %p140 = por %p138, %p139
      %p141 = scmp.ne.s32.totalorder %s132, %s133
      %p142 = scmp.eq.s32.totalorder %s26, 0
      %p143 = por %p141, %p142
      %p144 = scmp.ne.s32.totalorder %s132, %s133
      %p145 = scmp.eq.s32.totalorder %s27, 3
      %p146 = por %p144, %p145
      %p148 = scmp.ne.s32.totalorder %s133, %s147
      %p149 = scmp.eq.s32.totalorder %s27, 0
      %p150 = por %p148, %p149
      %s152 = sadd.s32 %s151, 1
      %p155 = scmp.eq.s32.totalorder %s21, 3
      %p156 = scmp.ne.s32.totalorder %s151, %s153
      %p157 = scmp.eq.s32.totalorder %s21, 0
      %p158 = por %p156, %p157
      %p159 = scmp.ne.s32.totalorder %s151, %s153
      %p160 = scmp.eq.s32.totalorder %s26, 3
      %p161 = por %p159, %p160
      %p162 = scmp.ne.s32.totalorder %s153, %s154
      %p163 = scmp.eq.s32.totalorder %s26, 0
      %p164 = por %p162, %p163
      %p165 = scmp.ne.s32.totalorder %s153, %s154
      %p166 = scmp.eq.s32.totalorder %s27, 3
      %p167 = por %p165, %p166
      %p169 = scmp.ne.s32.totalorder %s154, %s168
      %p170 = scmp.eq.s32.totalorder %s27, 0
      %p171 = por %p169, %p170
      %s173 = sadd.s32 %s172, 1
      %p176 = scmp.eq.s32.totalorder %s21, 3
      %p177 = scmp.ne.s32.totalorder %s172, %s174
      %p178 = scmp.eq.s32.totalorder %s21, 0
      %p179 = por %p177, %p178
      %p180 = scmp.ne.s32.totalorder %s172, %s174
      %p181 = scmp.eq.s32.totalorder %s26, 3
      %p182 = por %p180, %p181
      %p183 = scmp.ne.s32.totalorder %s174, %s175
      %p184 = scmp.eq.s32.totalorder %s26, 0
      %p185 = por %p183, %p184
      %p186 = scmp.ne.s32.totalorder %s174, %s175
      %p187 = scmp.eq.s32.totalorder %s27, 3
      %p188 = por %p186, %p187
      %p190 = scmp.ne.s32.totalorder %s175, %s189
      %p191 = scmp.eq.s32.totalorder %s27, 0
      %p192 = por %p190, %p191
      %s194 = sadd.s32 %s193, 1
      %p197 = scmp.eq.s32.totalorder %s21, 3
      %p198 = scmp.ne.s32.totalorder %s193, %s195
      %p199 = scmp.eq.s32.totalorder %s21, 0
      %p200 = por %p198, %p199
      %p201 = scmp.ne.s32.totalorder %s193, %s195
      %p202 = scmp.eq.s32.totalorder %s26, 3
      %p203 = por %p201, %p202
      %p204 = scmp.ne.s32.totalorder %s195, %s196
      %p205 = scmp.eq.s32.totalorder %s26, 0
      %p206 = por %p204, %p205
      %p207 = scmp.ne.s32.totalorder %s195, %s196
      %p208 = scmp.eq.s32.totalorder %s27, 3
      %p209 = por %p207, %p208
      %p211 = scmp.ne.s32.totalorder %s196, %s210
      %p212 = scmp.eq.s32.totalorder %s27, 0
      %p213 = por %p211, %p212
      %s215 = sadd.s32 %s214, 1
      %p218 = scmp.eq.s32.totalorder %s21, 3
      %p219 = scmp.ne.s32.totalorder %s214, %s216
      %p220 = scmp.eq.s32.totalorder %s21, 0
      %p221 = por %p219, %p220
      %p222 = scmp.ne.s32.totalorder %s214, %s216
      %p223 = scmp.eq.s32.totalorder %s26, 3
      %p224 = por %p222, %p223
      %p225 = scmp.ne.s32.totalorder %s216, %s217
      %p226 = scmp.eq.s32.totalorder %s26, 0
      %p227 = por %p225, %p226
      %p228 = scmp.ne.s32.totalorder %s216, %s217
      %p229 = scmp.eq.s32.totalorder %s27, 3
      %p230 = por %p228, %p229
      %p232 = scmp.ne.s32.totalorder %s217, %s231
      %p233 = scmp.eq.s32.totalorder %s27, 0
      %p234 = por %p232, %p233
      %s235 = ssub.s32 %s28, %s40
      %p236 = scmp.eq.s32.totalorder %s235, 0
      %s238 = sadd.s32 %s237, 1
      %s239 = scalar_select %p236, %s237, %s238
      %p242 = pneg %p236
      %p243 = scmp.eq.s32.totalorder %s21, 3
      %p244 = por %p242, %p243
      %p245 = scmp.ne.s32.totalorder %s237, %s240
      %p246 = scmp.eq.s32.totalorder %s21, 0
      %p247 = por %p245, %p246
      %p248 = scmp.ne.s32.totalorder %s237, %s240
      %p249 = scmp.eq.s32.totalorder %s26, 3
      %p250 = por %p248, %p249
      %p251 = scmp.ne.s32.totalorder %s240, %s241
      %p252 = scmp.eq.s32.totalorder %s26, 0
      %p253 = por %p251, %p252
      %p254 = scmp.ne.s32.totalorder %s240, %s241
      %p255 = scmp.eq.s32.totalorder %s27, 3
      %p256 = por %p254, %p255
      %p258 = scmp.ne.s32.totalorder %s241, %s257
      %p259 = scmp.eq.s32.totalorder %s27, 0
      %p260 = por %p258, %p259
      %s261 = ssub.s32 %s29, %s36
      %s262 = ssub.s32 %s28, %s40
      %s263 = sor.u32 %s261, %s262
      %p264 = scmp.eq.s32.totalorder %s263, 0
      %s266 = sadd.s32 %s265, 1
      %s267 = scalar_select %p264, %s265, %s266
      %p270 = pneg %p264
      %p271 = scmp.eq.s32.totalorder %s21, 3
      %p272 = por %p270, %p271
      %p273 = scmp.ne.s32.totalorder %s265, %s268
      %p274 = scmp.eq.s32.totalorder %s21, 0
      %p275 = por %p273, %p274
      %p276 = scmp.ne.s32.totalorder %s265, %s268
      %p277 = scmp.eq.s32.totalorder %s26, 3
      %p278 = por %p276, %p277
      %p279 = scmp.ne.s32.totalorder %s268, %s269
      %p280 = scmp.eq.s32.totalorder %s26, 0
      %p281 = por %p279, %p280
      %p282 = scmp.ne.s32.totalorder %s268, %s269
      %p283 = scmp.eq.s32.totalorder %s27, 3
      %p284 = por %p282, %p283
      %p286 = scmp.ne.s32.totalorder %s269, %s285
      %p287 = scmp.eq.s32.totalorder %s27, 0
      %p288 = por %p286, %p287
      %p289 = scmp.le.s32.totalorder 1, %s21
      %p290 = scmp.lt.s32.totalorder %s21, 5
      %p291 = pnand %p289, %p290
      %p292 = pneg %p291
      // Predicated region
      $region9: #{embed_rrn_forward.1} parent=5 // pred_check
        _
      $region10: #{embed_rrn_forward.1} parent=5 // pred_check_branch
        %294 = sbr.rel (%p291) target = $region12
      $region11: #{embed_rrn_forward.1} parent=5 // pred_region
        %s295 = ssub.s32 %s21, 1
        // Predicated region
        $region13: #{embed_rrn_forward.1} parent=11 // pred_check
          %p296 = pneg %p80
        $region14: #{embed_rrn_forward.1} parent=11 // pred_check_branch
          %298 = sbr.rel (%p296) target = $region16
        $region15: #{embed_rrn_forward.1} parent=11 // pred_region
          _
        $region16: #{embed_rrn_forward.1} parent=11 // pred_fallthru
          _
        // Predicated region
        $region17: #{embed_rrn_forward.1} parent=11 // pred_check
          %p299 = pneg %p101
        $region18: #{embed_rrn_forward.1} parent=11 // pred_check_branch
          %301 = sbr.rel (%p299) target = $region20
        $region19: #{embed_rrn_forward.1} parent=11 // pred_region
          _
        $region20: #{embed_rrn_forward.1} parent=11 // pred_fallthru
          _
        // Predicated region
        $region21: #{embed_rrn_forward.1} parent=11 // pred_check
          %p302 = pneg %p122
        $region22: #{embed_rrn_forward.1} parent=11 // pred_check_branch
          %304 = sbr.rel (%p302) target = $region24
        $region23: #{embed_rrn_forward.1} parent=11 // pred_region
          _
        $region24: #{embed_rrn_forward.1} parent=11 // pred_fallthru
          _
        // Predicated region
        $region25: #{embed_rrn_forward.1} parent=11 // pred_check
          %p305 = pneg %p143
        $region26: #{embed_rrn_forward.1} parent=11 // pred_check_branch
          %307 = sbr.rel (%p305) target = $region28
        $region27: #{embed_rrn_forward.1} parent=11 // pred_region
          %309 = vsyncadd [#allocation6], 0
          %s310 = sshll.u32 %s4, 4
          %s311 = int_to_ptr.hbm [resolvable:$true] %s310
          %s312 = sshll.u32 [#allocation5], 4
          %s313 = int_to_ptr.vmem [resolvable:$true] %s312
          %318 = dma.hbm_to_vmem [thread:$0]  %s311, 14336, %s313, [#allocation6], 64, 64, 4
        $region28: #{embed_rrn_forward.1} parent=11 // pred_fallthru
          _
        // Predicated region
        $region29: #{embed_rrn_forward.1} parent=11 // pred_check
          %p319 = pneg %p164
        $region30: #{embed_rrn_forward.1} parent=11 // pred_check_branch
          %321 = sbr.rel (%p319) target = $region32
        $region31: #{embed_rrn_forward.1} parent=11 // pred_region
          _
        $region32: #{embed_rrn_forward.1} parent=11 // pred_fallthru
          _
        // Predicated region
        $region33: #{embed_rrn_forward.1} parent=11 // pred_check
          %p322 = pneg %p185
        $region34: #{embed_rrn_forward.1} parent=11 // pred_check_branch
          %324 = sbr.rel (%p322) target = $region36
        $region35: #{embed_rrn_forward.1} parent=11 // pred_region
          _
        $region36: #{embed_rrn_forward.1} parent=11 // pred_fallthru
          _
        // Predicated region
        $region37: #{embed_rrn_forward.1} parent=11 // pred_check
          %p325 = pneg %p206
        $region38: #{embed_rrn_forward.1} parent=11 // pred_check_branch
          %327 = sbr.rel (%p325) target = $region40
        $region39: #{embed_rrn_forward.1} parent=11 // pred_region
          %329 = vsyncadd [#allocation9], 0
          %s330 = sshll.u32 %s7, 4
          %s331 = int_to_ptr.hbm [resolvable:$true] %s330
          %s332 = sshll.u32 [#allocation8], 4
          %s333 = int_to_ptr.vmem [resolvable:$true] %s332
          %338 = dma.hbm_to_vmem [thread:$0]  %s331, 4096, %s333, [#allocation9], 256, 256, 16
        $region40: #{embed_rrn_forward.1} parent=11 // pred_fallthru
          _
        // Predicated region
        $region41: #{embed_rrn_forward.1} parent=11 // pred_check
          %p339 = pneg %p227
        $region42: #{embed_rrn_forward.1} parent=11 // pred_check_branch
          %341 = sbr.rel (%p339) target = $region44
        $region43: #{embed_rrn_forward.1} parent=11 // pred_region
          _
        $region44: #{embed_rrn_forward.1} parent=11 // pred_fallthru
          _
      $region12: #{embed_rrn_forward.1} parent=5 // pred_fallthru
        _
      %p342 = scmp.lt.s32.totalorder %s21, 4
      // Predicated region
      $region45: #{embed_rrn_forward.1} parent=5 // pred_check
        %p343 = pneg %p342
      $region46: #{embed_rrn_forward.1} parent=5 // pred_check_branch
        %345 = sbr.rel (%p343) target = $region48
      $region47: #{embed_rrn_forward.1} parent=5 // pred_region
        // Predicated region
        $region49: #{embed_rrn_forward.1} parent=47 // pred_check
          %p346 = pneg %p53
        $region50: #{embed_rrn_forward.1} parent=47 // pred_check_branch
          %348 = sbr.rel (%p346) target = $region52
        $region51: #{embed_rrn_forward.1} parent=47 // pred_region
          %s349 = smul.u32 2, %s28
          %p350 = scmp.lt.s32.totalorder %s349, 3
          %s351 = scalar_select %p350, %s349, 3
          %s352 = smul.addr %s351, 8
          %s353 = scalar_lea.vmem %s0, %s352
          %s354 = smul.u32 2, %s28
        $region52: #{embed_rrn_forward.1} parent=47 // pred_fallthru
          _
        // Predicated region
        $region53: #{embed_rrn_forward.1} parent=47 // pred_check
          %p355 = pneg %p247
        $region54: #{embed_rrn_forward.1} parent=47 // pred_check_branch
          %357 = sbr.rel (%p355) target = $region56
        $region55: #{embed_rrn_forward.1} parent=47 // pred_region
          %s358 = smul.u32 2, %s28
          %p359 = scmp.lt.s32.totalorder %s358, 3
          %s360 = scalar_select %p359, %s358, 3
          %s361 = smul.addr %s360, 8
          %s362 = scalar_lea.vmem %s9, %s361
          %s363 = smul.u32 2, %s28
        $region56: #{embed_rrn_forward.1} parent=47 // pred_fallthru
          _
      $region48: #{embed_rrn_forward.1} parent=5 // pred_fallthru
        _
      %p364 = scmp.le.s32.totalorder 1, %s21
      %p365 = scmp.lt.s32.totalorder %s21, 5
      %p366 = pnand %p364, %p365
      %p367 = pneg %p366
      // Predicated region
      $region57: #{embed_rrn_forward.1} parent=5 // pred_check
        _
      $region58: #{embed_rrn_forward.1} parent=5 // pred_check_branch
        %369 = sbr.rel (%p366) target = $region60
      $region59: #{embed_rrn_forward.1} parent=5 // pred_region
        %s370 = ssub.s32 %s21, 1
        // Predicated region
        $region61: #{embed_rrn_forward.1} parent=59 // pred_check
          %p371 = pneg %p143
        $region62: #{embed_rrn_forward.1} parent=59 // pred_check_branch
          %373 = sbr.rel (%p371) target = $region64
        $region63: #{embed_rrn_forward.1} parent=59 // pred_region
          %375 = dma.done [#allocation6], 14336
        $region64: #{embed_rrn_forward.1} parent=59 // pred_fallthru
          _
        // Predicated region
        $region65: #{embed_rrn_forward.1} parent=59 // pred_check
          %p376 = pneg %p206
        $region66: #{embed_rrn_forward.1} parent=59 // pred_check_branch
          %378 = sbr.rel (%p376) target = $region68
        $region67: #{embed_rrn_forward.1} parent=59 // pred_region
          %380 = dma.done [#allocation9], 4096
        $region68: #{embed_rrn_forward.1} parent=59 // pred_fallthru
          _
        %s381 = smul.u32 2, %s30
        %p382 = scmp.lt.s32.totalorder %s381, 3
        %s383 = scalar_select %p382, %s381, 3
        %s384 = smul.addr %s383, 8
        %s385 = scalar_lea.vmem %s0, %s384
        %p386 = pneg %p59
        %p387 = pneg %p56
        %p388 = pneg %p80
        %p389 = pneg %p77
        %p390 = pneg %p101
        %p391 = pneg %p98
        %p392 = pneg %p122
        %p393 = pneg %p119
        %p394 = pneg %p143
        %p395 = pneg %p140
        %p396 = pneg %p164
        %p397 = pneg %p161
        %p398 = pneg %p185
        %p399 = pneg %p182
        %p400 = pneg %p206
        %p401 = pneg %p203
        %p402 = pneg %p227
        %p403 = pneg %p224
        %s404 = smul.u32 2, %s30
        %p405 = scmp.lt.s32.totalorder %s404, 3
        %s406 = scalar_select %p405, %s404, 3
        %s407 = smul.addr %s406, 8
        %s408 = scalar_lea.vmem %s9, %s407
        %p409 = pneg %p253
        %p410 = pneg %p250
        %p411 = pneg %p281
        %p412 = pneg %p278
        %s413 = sand.u32 %s268, 1
        %s414 = scalar_lea.sflag [#allocation7], %s413
        %s415 = sand.u32 %s268, 1
        %s416 = smul.addr %s415, 16
        %s417 = scalar_lea.vmem [#allocation10], %s416
        %s418 = smul.u32 2, %s30
        %p419 = scmp.lt.s32.totalorder %s418, 3
        %s420 = scalar_select %p419, %s418, 3
        %s421 = smul.addr %s420, 8
        %s422 = scalar_lea.vmem %s0, %s421
        %s423 = smul.u32 2, %s30
        %s424 = smul.u32 2, %s30
        %p425 = scmp.lt.s32.totalorder %s424, 3
        %s426 = scalar_select %p425, %s424, 3
        %s427 = smul.addr %s426, 8
        %s428 = scalar_lea.vmem %s9, %s427
        %s429 = smul.u32 2, %s30
        %s430 = smul.u32 2, %s30
        %p432 = scmp.eq.s32.totalorder %s31, 0
        // Predicated region
        $region69: #{embed_rrn_forward.1} parent=59 // pred_check
          %p433 = pneg %p432
        $region70: #{embed_rrn_forward.1} parent=59 // pred_check_branch
          %435 = sbr.rel (%p433) target = $region72
        $region71: #{embed_rrn_forward.1} parent=59 // pred_region
          %v436 = vld [vmem:[%s422] sm:$0xff]
          %v437 = vld [vmem:[%s422 + $0x8] sm:$0xff]
          %v438 = vld [vmem:[#allocation5] sm:$0xf]
          %v439 = vld [vmem:[#allocation5 + $0x4] sm:$0xf]
          %v440 = vld [vmem:[#allocation5 + $0x8] sm:$0xf]
          %v441 = vld [vmem:[#allocation5 + $0xc] sm:$0xf]
          %v442 = vld [vmem:[#allocation5 + $0x10] sm:$0xf]
          %v443 = vld [vmem:[#allocation5 + $0x14] sm:$0xf]
          %v444 = vld [vmem:[#allocation5 + $0x18] sm:$0xf]
          %v445 = vld [vmem:[#allocation5 + $0x1c] sm:$0xf]
          %v446 = vld [vmem:[#allocation5 + $0x20] sm:$0xf]
          %v447 = vld [vmem:[#allocation5 + $0x24] sm:$0xf]
          %v448 = vld [vmem:[#allocation5 + $0x28] sm:$0xf]
          %v449 = vld [vmem:[#allocation5 + $0x2c] sm:$0xf]
          %v450 = vld [vmem:[#allocation5 + $0x30] sm:$0xf]
          %v451 = vld [vmem:[#allocation5 + $0x34] sm:$0xf]
          %v452 = vld [vmem:[#allocation5 + $0x38] sm:$0xf]
          %v453 = vld [vmem:[#allocation5 + $0x3c] sm:$0xf]
          %v454 = vpack.c.bf16 %v437, %v436
          %v455 = vld [vmem:[%s5] sm:$0x1]
          %v457 = vperm.slane %v455, 0
          %v475 = vunpack.c.l.b16 %v438
          %v476 = vunpack.c.l.b16 %v439
          %v477 = vunpack.c.l.b16 %v440
          %v478 = vunpack.c.l.b16 %v441
          %v479 = vunpack.c.l.b16 %v442
          %v480 = vunpack.c.l.b16 %v443
          %v481 = vunpack.c.l.b16 %v444
          %v482 = vunpack.c.l.b16 %v445
          %v483 = vunpack.c.l.b16 %v446
          %v484 = vunpack.c.l.b16 %v447
          %v485 = vunpack.c.l.b16 %v448
          %v486 = vunpack.c.l.b16 %v449
          %v487 = vunpack.c.l.b16 %v450
          %v488 = vunpack.c.l.b16 %v451
          %v489 = vunpack.c.l.b16 %v452
          %v490 = vunpack.c.l.b16 %v453
          %v491 = vpack.c.b16 %v476, %v475
          %v492 = vpack.c.b16 %v478, %v477
          %v493 = vpack.c.b16 %v480, %v479
          %v494 = vpack.c.b16 %v482, %v481
          %v495 = vpack.c.b16 %v484, %v483
          %v496 = vpack.c.b16 %v486, %v485
          %v497 = vpack.c.b16 %v488, %v487
          %v498 = vpack.c.b16 %v490, %v489
          %507 = vmatpush.bf16.msra.mxu0 %v498
          %508 = vmatpush.bf16.msra.mxu0 %v497
          %509 = vmatpush.bf16.msra.mxu0 %v496
          %510 = vmatpush.bf16.msra.mxu0 %v495
          %511 = vmatpush.bf16.msra.mxu0 %v494
          %512 = vmatpush.bf16.msra.mxu0 %v493
          %513 = vmatpush.bf16.msra.mxu0 %v492
          %514 = vmatpush.bf16.msra.mxu0 %v491
          %515 = vmatmul.bf16.gmra.mxu0 %v454
          %v516 = vpop.f32.mrf.mxu0
          %v517 = vadd.f32 %v457, %v516
          %v518 = vpop.f32.mrf.mxu0
          %v519 = vadd.f32 %v457, %v518
          %520 = vdwg.mxu0
          %v521 = vmax.f32 %v517, 0.0
          %v522 = vmax.f32 %v519, 0.0
          %s523 = scalar_lea.vmem [#allocation5], 64
          %v524 = vld [vmem:[%s523] sm:$0xf]
          %v525 = vld [vmem:[%s523 + $0x4] sm:$0xf]
          %v526 = vld [vmem:[%s523 + $0x8] sm:$0xf]
          %v527 = vld [vmem:[%s523 + $0xc] sm:$0xf]
          %v528 = vld [vmem:[%s523 + $0x10] sm:$0xf]
          %v529 = vld [vmem:[%s523 + $0x14] sm:$0xf]
          %v530 = vld [vmem:[%s523 + $0x18] sm:$0xf]
          %v531 = vld [vmem:[%s523 + $0x1c] sm:$0xf]
          %v532 = vld [vmem:[%s523 + $0x20] sm:$0xf]
          %v533 = vld [vmem:[%s523 + $0x24] sm:$0xf]
          %v534 = vld [vmem:[%s523 + $0x28] sm:$0xf]
          %v535 = vld [vmem:[%s523 + $0x2c] sm:$0xf]
          %v536 = vld [vmem:[%s523 + $0x30] sm:$0xf]
          %v537 = vld [vmem:[%s523 + $0x34] sm:$0xf]
          %v538 = vld [vmem:[%s523 + $0x38] sm:$0xf]
          %v539 = vld [vmem:[%s523 + $0x3c] sm:$0xf]
          %v540 = vpack.c.bf16 %v522, %v521
          %s541 = scalar_lea.vmem %s5, 1
          %v542 = vld [vmem:[%s541] sm:$0x1]
          %v544 = vperm.slane %v542, 0
          %v562 = vunpack.c.l.b16 %v524
          %v563 = vunpack.c.l.b16 %v525
          %v564 = vunpack.c.l.b16 %v526
          %v565 = vunpack.c.l.b16 %v527
          %v566 = vunpack.c.l.b16 %v528
          %v567 = vunpack.c.l.b16 %v529
          %v568 = vunpack.c.l.b16 %v530
          %v569 = vunpack.c.l.b16 %v531
          %v570 = vunpack.c.l.b16 %v532
          %v571 = vunpack.c.l.b16 %v533
          %v572 = vunpack.c.l.b16 %v534
          %v573 = vunpack.c.l.b16 %v535
          %v574 = vunpack.c.l.b16 %v536
          %v575 = vunpack.c.l.b16 %v537
          %v576 = vunpack.c.l.b16 %v538
          %v577 = vunpack.c.l.b16 %v539
          %v578 = vpack.c.b16 %v563, %v562
          %v579 = vpack.c.b16 %v565, %v564
          %v580 = vpack.c.b16 %v567, %v566
          %v581 = vpack.c.b16 %v569, %v568
          %v582 = vpack.c.b16 %v571, %v570
          %v583 = vpack.c.b16 %v573, %v572
          %v584 = vpack.c.b16 %v575, %v574
          %v585 = vpack.c.b16 %v577, %v576
          %594 = vmatpush.bf16.msra.mxu0 %v585
          %595 = vmatpush.bf16.msra.mxu0 %v584
          %596 = vmatpush.bf16.msra.mxu0 %v583
          %597 = vmatpush.bf16.msra.mxu0 %v582
          %598 = vmatpush.bf16.msra.mxu0 %v581
          %599 = vmatpush.bf16.msra.mxu0 %v580
          %600 = vmatpush.bf16.msra.mxu0 %v579
          %601 = vmatpush.bf16.msra.mxu0 %v578
          %602 = vmatmul.bf16.gmra.mxu0 %v540
          %v603 = vpop.f32.mrf.mxu0
          %v604 = vadd.f32 %v544, %v603
          %v605 = vpop.f32.mrf.mxu0
          %v606 = vadd.f32 %v544, %v605
          %607 = vdwg.mxu0
          %v608 = vmax.f32 %v604, 0.0
          %v609 = vmax.f32 %v606, 0.0
          %s610 = scalar_lea.vmem [#allocation5], 128
          %v611 = vld [vmem:[%s610] sm:$0xf]
          %v612 = vld [vmem:[%s610 + $0x4] sm:$0xf]
          %v613 = vld [vmem:[%s610 + $0x8] sm:$0xf]
          %v614 = vld [vmem:[%s610 + $0xc] sm:$0xf]
          %v615 = vld [vmem:[%s610 + $0x10] sm:$0xf]
          %v616 = vld [vmem:[%s610 + $0x14] sm:$0xf]
          %v617 = vld [vmem:[%s610 + $0x18] sm:$0xf]
          %v618 = vld [vmem:[%s610 + $0x1c] sm:$0xf]
          %v619 = vld [vmem:[%s610 + $0x20] sm:$0xf]
          %v620 = vld [vmem:[%s610 + $0x24] sm:$0xf]
          %v621 = vld [vmem:[%s610 + $0x28] sm:$0xf]
          %v622 = vld [vmem:[%s610 + $0x2c] sm:$0xf]
          %v623 = vld [vmem:[%s610 + $0x30] sm:$0xf]
          %v624 = vld [vmem:[%s610 + $0x34] sm:$0xf]
          %v625 = vld [vmem:[%s610 + $0x38] sm:$0xf]
          %v626 = vld [vmem:[%s610 + $0x3c] sm:$0xf]
          %v627 = vpack.c.bf16 %v609, %v608
          %s628 = scalar_lea.vmem %s5, 2
          %v629 = vld [vmem:[%s628] sm:$0x1]
          %v631 = vperm.slane %v629, 0
          %v649 = vunpack.c.l.b16 %v611
          %v650 = vunpack.c.l.b16 %v612
          %v651 = vunpack.c.l.b16 %v613
          %v652 = vunpack.c.l.b16 %v614
          %v653 = vunpack.c.l.b16 %v615
          %v654 = vunpack.c.l.b16 %v616
          %v655 = vunpack.c.l.b16 %v617
          %v656 = vunpack.c.l.b16 %v618
          %v657 = vunpack.c.l.b16 %v619
          %v658 = vunpack.c.l.b16 %v620
          %v659 = vunpack.c.l.b16 %v621
          %v660 = vunpack.c.l.b16 %v622
          %v661 = vunpack.c.l.b16 %v623
          %v662 = vunpack.c.l.b16 %v624
          %v663 = vunpack.c.l.b16 %v625
          %v664 = vunpack.c.l.b16 %v626
          %v665 = vpack.c.b16 %v650, %v649
          %v666 = vpack.c.b16 %v652, %v651
          %v667 = vpack.c.b16 %v654, %v653
          %v668 = vpack.c.b16 %v656, %v655
          %v669 = vpack.c.b16 %v658, %v657
          %v670 = vpack.c.b16 %v660, %v659
          %v671 = vpack.c.b16 %v662, %v661
          %v672 = vpack.c.b16 %v664, %v663
          %681 = vmatpush.bf16.msra.mxu0 %v672
          %682 = vmatpush.bf16.msra.mxu0 %v671
          %683 = vmatpush.bf16.msra.mxu0 %v670
          %684 = vmatpush.bf16.msra.mxu0 %v669
          %685 = vmatpush.bf16.msra.mxu0 %v668
          %686 = vmatpush.bf16.msra.mxu0 %v667
          %687 = vmatpush.bf16.msra.mxu0 %v666
          %688 = vmatpush.bf16.msra.mxu0 %v665
          %689 = vmatmul.bf16.gmra.mxu0 %v627
          %v690 = vpop.f32.mrf.mxu0
          %v691 = vadd.f32 %v631, %v690
          %v692 = vpop.f32.mrf.mxu0
          %v693 = vadd.f32 %v631, %v692
          %694 = vdwg.mxu0
          %695 = vst [vmem:[#allocation2] sm:$0xff] %v691
          %696 = vst [vmem:[#allocation2 + $0x8] sm:$0xff] %v693
          %697 = vst [vmem:[#allocation3] sm:$0xff] %v691
          %698 = vst [vmem:[#allocation3 + $0x8] sm:$0xff] %v693
          %v699 = vld [vmem:[%s428] sm:$0xff]
          %v700 = vld [vmem:[%s428 + $0x8] sm:$0xff]
          %701 = vst [vmem:[#allocation4] sm:$0xff] %v699
          %702 = vst [vmem:[#allocation4 + $0x8] sm:$0xff] %v700
        $region72: #{embed_rrn_forward.1} parent=59 // pred_fallthru
          _
        %v703 = vld [vmem:[#allocation2] sm:$0xff]
        %v704 = vld [vmem:[#allocation2 + $0x8] sm:$0xff]
        %v705 = vld [vmem:[#allocation3] sm:$0xff]
        %v706 = vld [vmem:[#allocation3 + $0x8] sm:$0xff]
        %v707 = vld [vmem:[#allocation4] sm:$0xff]
        %v708 = vld [vmem:[#allocation4 + $0x8] sm:$0xff]
        %s709 = scalar_lea.vmem [#allocation5], 192
        %v710 = vld [vmem:[%s709] sm:$0xf]
        %v711 = vld [vmem:[%s709 + $0x4] sm:$0xf]
        %v712 = vld [vmem:[%s709 + $0x8] sm:$0xf]
        %v713 = vld [vmem:[%s709 + $0xc] sm:$0xf]
        %v714 = vld [vmem:[%s709 + $0x10] sm:$0xf]
        %v715 = vld [vmem:[%s709 + $0x14] sm:$0xf]
        %v716 = vld [vmem:[%s709 + $0x18] sm:$0xf]
        %v717 = vld [vmem:[%s709 + $0x1c] sm:$0xf]
        %v718 = vld [vmem:[%s709 + $0x20] sm:$0xf]
        %v719 = vld [vmem:[%s709 + $0x24] sm:$0xf]
        %v720 = vld [vmem:[%s709 + $0x28] sm:$0xf]
        %v721 = vld [vmem:[%s709 + $0x2c] sm:$0xf]
        %v722 = vld [vmem:[%s709 + $0x30] sm:$0xf]
        %v723 = vld [vmem:[%s709 + $0x34] sm:$0xf]
        %v724 = vld [vmem:[%s709 + $0x38] sm:$0xf]
        %v725 = vld [vmem:[%s709 + $0x3c] sm:$0xf]
        %v726 = vpack.c.bf16 %v706, %v705
        %s727 = scalar_lea.vmem %s5, 3
        %v728 = vld [vmem:[%s727] sm:$0x1]
        %v730 = vperm.slane %v728, 0
        %v748 = vunpack.c.l.b16 %v710
        %v749 = vunpack.c.l.b16 %v711
        %v750 = vunpack.c.l.b16 %v712
        %v751 = vunpack.c.l.b16 %v713
        %v752 = vunpack.c.l.b16 %v714
        %v753 = vunpack.c.l.b16 %v715
        %v754 = vunpack.c.l.b16 %v716
        %v755 = vunpack.c.l.b16 %v717
        %v756 = vunpack.c.l.b16 %v718
        %v757 = vunpack.c.l.b16 %v719
        %v758 = vunpack.c.l.b16 %v720
        %v759 = vunpack.c.l.b16 %v721
        %v760 = vunpack.c.l.b16 %v722
        %v761 = vunpack.c.l.b16 %v723
        %v762 = vunpack.c.l.b16 %v724
        %v763 = vunpack.c.l.b16 %v725
        %v764 = vpack.c.b16 %v749, %v748
        %v765 = vpack.c.b16 %v751, %v750
        %v766 = vpack.c.b16 %v753, %v752
        %v767 = vpack.c.b16 %v755, %v754
        %v768 = vpack.c.b16 %v757, %v756
        %v769 = vpack.c.b16 %v759, %v758
        %v770 = vpack.c.b16 %v761, %v760
        %v771 = vpack.c.b16 %v763, %v762
        %780 = vmatpush.bf16.msra.mxu0 %v771
        %781 = vmatpush.bf16.msra.mxu0 %v770
        %782 = vmatpush.bf16.msra.mxu0 %v769
        %783 = vmatpush.bf16.msra.mxu0 %v768
        %784 = vmatpush.bf16.msra.mxu0 %v767
        %785 = vmatpush.bf16.msra.mxu0 %v766
        %786 = vmatpush.bf16.msra.mxu0 %v765
        %787 = vmatpush.bf16.msra.mxu0 %v764
        %788 = vmatmul.bf16.gmra.mxu0 %v726
        %v789 = vpop.f32.mrf.mxu0
        %v790 = vadd.f32 %v730, %v789
        %v791 = vpop.f32.mrf.mxu0
        %v792 = vadd.f32 %v730, %v791
        %793 = vdwg.mxu0
        %s794 = scalar_lea.vmem [#allocation5], 256
        %v795 = vld [vmem:[%s794] sm:$0xf]
        %v796 = vld [vmem:[%s794 + $0x4] sm:$0xf]
        %v797 = vld [vmem:[%s794 + $0x8] sm:$0xf]
        %v798 = vld [vmem:[%s794 + $0xc] sm:$0xf]
        %v799 = vld [vmem:[%s794 + $0x10] sm:$0xf]
        %v800 = vld [vmem:[%s794 + $0x14] sm:$0xf]
        %v801 = vld [vmem:[%s794 + $0x18] sm:$0xf]
        %v802 = vld [vmem:[%s794 + $0x1c] sm:$0xf]
        %v803 = vld [vmem:[%s794 + $0x20] sm:$0xf]
        %v804 = vld [vmem:[%s794 + $0x24] sm:$0xf]
        %v805 = vld [vmem:[%s794 + $0x28] sm:$0xf]
        %v806 = vld [vmem:[%s794 + $0x2c] sm:$0xf]
        %v807 = vld [vmem:[%s794 + $0x30] sm:$0xf]
        %v808 = vld [vmem:[%s794 + $0x34] sm:$0xf]
        %v809 = vld [vmem:[%s794 + $0x38] sm:$0xf]
        %v810 = vld [vmem:[%s794 + $0x3c] sm:$0xf]
        %v827 = vunpack.c.l.b16 %v795
        %v828 = vunpack.c.l.b16 %v796
        %v829 = vunpack.c.l.b16 %v797
        %v830 = vunpack.c.l.b16 %v798
        %v831 = vunpack.c.l.b16 %v799
        %v832 = vunpack.c.l.b16 %v800
        %v833 = vunpack.c.l.b16 %v801
        %v834 = vunpack.c.l.b16 %v802
        %v835 = vunpack.c.l.b16 %v803
        %v836 = vunpack.c.l.b16 %v804
        %v837 = vunpack.c.l.b16 %v805
        %v838 = vunpack.c.l.b16 %v806
        %v839 = vunpack.c.l.b16 %v807
        %v840 = vunpack.c.l.b16 %v808
        %v841 = vunpack.c.l.b16 %v809
        %v842 = vunpack.c.l.b16 %v810
        %v843 = vpack.c.b16 %v828, %v827
        %v844 = vpack.c.b16 %v830, %v829
        %v845 = vpack.c.b16 %v832, %v831
        %v846 = vpack.c.b16 %v834, %v833
        %v847 = vpack.c.b16 %v836, %v835
        %v848 = vpack.c.b16 %v838, %v837
        %v849 = vpack.c.b16 %v840, %v839
        %v850 = vpack.c.b16 %v842, %v841
        %859 = vmatpush.bf16.msra.mxu0 %v850
        %860 = vmatpush.bf16.msra.mxu0 %v849
        %861 = vmatpush.bf16.msra.mxu0 %v848
        %862 = vmatpush.bf16.msra.mxu0 %v847
        %863 = vmatpush.bf16.msra.mxu0 %v846
        %864 = vmatpush.bf16.msra.mxu0 %v845
        %865 = vmatpush.bf16.msra.mxu0 %v844
        %866 = vmatpush.bf16.msra.mxu0 %v843
        %867 = vmatmul.bf16.gmra.mxu0 %v726
        %v868 = vpop.f32.mrf.mxu0
        %v869 = vadd.f32 0.0, %v868
        %v870 = vpop.f32.mrf.mxu0
        %v871 = vadd.f32 0.0, %v870
        %872 = vdwg.mxu0
        %v873 = vld [vmem:[%s1] sm:$0xf]
        %v874 = vld [vmem:[%s1 + $0x4] sm:$0xf]
        %v875 = vld [vmem:[%s1 + $0x8] sm:$0xf]
        %v876 = vld [vmem:[%s1 + $0xc] sm:$0xf]
        %v877 = vld [vmem:[%s1 + $0x10] sm:$0xf]
        %v878 = vld [vmem:[%s1 + $0x14] sm:$0xf]
        %v879 = vld [vmem:[%s1 + $0x18] sm:$0xf]
        %v880 = vld [vmem:[%s1 + $0x1c] sm:$0xf]
        %v881 = vld [vmem:[%s1 + $0x20] sm:$0xf]
        %v882 = vld [vmem:[%s1 + $0x24] sm:$0xf]
        %v883 = vld [vmem:[%s1 + $0x28] sm:$0xf]
        %v884 = vld [vmem:[%s1 + $0x2c] sm:$0xf]
        %v885 = vld [vmem:[%s1 + $0x30] sm:$0xf]
        %v886 = vld [vmem:[%s1 + $0x34] sm:$0xf]
        %v887 = vpack.c.bf16 %v792, %v790
        %v888 = vld [vmem:[%s2] sm:$0xf]
        %v889 = vld [vmem:[%s2 + $0x4] sm:$0xf]
        %v890 = vld [vmem:[%s2 + $0x8] sm:$0xf]
        %v891 = vld [vmem:[%s2 + $0xc] sm:$0xf]
        %v892 = vld [vmem:[%s2 + $0x10] sm:$0xf]
        %v893 = vld [vmem:[%s2 + $0x14] sm:$0xf]
        %v894 = vld [vmem:[%s2 + $0x18] sm:$0xf]
        %v895 = vld [vmem:[%s2 + $0x1c] sm:$0xf]
        %v896 = vld [vmem:[%s2 + $0x20] sm:$0xf]
        %v897 = vld [vmem:[%s2 + $0x24] sm:$0xf]
        %v898 = vld [vmem:[%s2 + $0x28] sm:$0xf]
        %v899 = vld [vmem:[%s2 + $0x2c] sm:$0xf]
        %v900 = vld [vmem:[%s2 + $0x30] sm:$0xf]
        %v901 = vld [vmem:[%s2 + $0x34] sm:$0xf]
        %v902 = vpack.c.bf16 %v871, %v869
        %v917 = vunpack.c.l.b16 %v888
        %v918 = vunpack.c.l.b16 %v889
        %v919 = vunpack.c.l.b16 %v890
        %v920 = vunpack.c.l.b16 %v891
        %v921 = vunpack.c.l.b16 %v892
        %v922 = vunpack.c.l.b16 %v893
        %v923 = vunpack.c.l.b16 %v894
        %v924 = vunpack.c.l.b16 %v895
        %v925 = vunpack.c.l.b16 %v896
        %v926 = vunpack.c.l.b16 %v897
        %v927 = vunpack.c.l.b16 %v898
        %v928 = vunpack.c.l.b16 %v899
        %v929 = vunpack.c.l.b16 %v900
        %v930 = vunpack.c.l.b16 %v901
        %v931 = vpack.c.b16 %v918, %v917
        %v932 = vpack.c.b16 %v920, %v919
        %v933 = vpack.c.b16 %v922, %v921
        %v934 = vpack.c.b16 %v924, %v923
        %v935 = vpack.c.b16 %v926, %v925
        %v936 = vpack.c.b16 %v928, %v927
        %v937 = vpack.c.b16 %v930, %v929
        %vm938 = vcmask 130048
        %v940 = vsel %vm938, %v931, 0
        %v943 = vsel %vm938, %v932, 0
        %v946 = vsel %vm938, %v933, 0
        %v949 = vsel %vm938, %v934, 0
        %v952 = vsel %vm938, %v935, 0
        %v955 = vsel %vm938, %v936, 0
        %v958 = vsel %vm938, %v937, 0
        %960 = vmatpush.bf16.msra.mxu0 0
        %961 = vmatpush.bf16.msra.mxu0 0
        %962 = vmatpush.bf16.msra.mxu0 0
        %963 = vmatpush.bf16.msra.mxu0 0
        %964 = vmatpush.bf16.msra.mxu0 0
        %965 = vmatpush.bf16.msra.mxu0 0
        %966 = vmatpush.bf16.msra.mxu0 0
        %967 = vmatpush.bf16.msra.mxu0 %v902
        %968 = vmatmul.bf16.gmra.mxu0 %v940
        %v969 = vpop.f32.mrf.mxu0
        %v970 = vadd.f32 0.0, %v969
        %v971 = vpop.f32.mrf.mxu0
        %v972 = vadd.f32 0.0, %v971
        %973 = vmatmul.bf16.gmra.mxu0 %v943
        %v974 = vpop.f32.mrf.mxu0
        %v975 = vadd.f32 0.0, %v974
        %v976 = vpop.f32.mrf.mxu0
        %v977 = vadd.f32 0.0, %v976
        %978 = vmatmul.bf16.gmra.mxu0 %v946
        %v979 = vpop.f32.mrf.mxu0
        %v980 = vadd.f32 0.0, %v979
        %v981 = vpop.f32.mrf.mxu0
        %v982 = vadd.f32 0.0, %v981
        %983 = vmatmul.bf16.gmra.mxu0 %v949
        %v984 = vpop.f32.mrf.mxu0
        %v985 = vadd.f32 0.0, %v984
        %v986 = vpop.f32.mrf.mxu0
        %v987 = vadd.f32 0.0, %v986
        %988 = vmatmul.bf16.gmra.mxu0 %v952
        %v989 = vpop.f32.mrf.mxu0
        %v990 = vadd.f32 0.0, %v989
        %v991 = vpop.f32.mrf.mxu0
        %v992 = vadd.f32 0.0, %v991
        %993 = vmatmul.bf16.gmra.mxu0 %v955
        %v994 = vpop.f32.mrf.mxu0
        %v995 = vadd.f32 0.0, %v994
        %v996 = vpop.f32.mrf.mxu0
        %v997 = vadd.f32 0.0, %v996
        %998 = vmatmul.bf16.gmra.mxu0 %v958
        %v999 = vpop.f32.mrf.mxu0
        %v1000 = vadd.f32 0.0, %v999
        %v1001 = vpop.f32.mrf.mxu0
        %v1002 = vadd.f32 0.0, %v1001
        %1003 = vdwg.mxu0
        %v1018 = vunpack.c.l.b16 %v873
        %v1019 = vunpack.c.l.b16 %v874
        %v1020 = vunpack.c.l.b16 %v875
        %v1021 = vunpack.c.l.b16 %v876
        %v1022 = vunpack.c.l.b16 %v877
        %v1023 = vunpack.c.l.b16 %v878
        %v1024 = vunpack.c.l.b16 %v879
        %v1025 = vunpack.c.l.b16 %v880
        %v1026 = vunpack.c.l.b16 %v881
        %v1027 = vunpack.c.l.b16 %v882
        %v1028 = vunpack.c.l.b16 %v883
        %v1029 = vunpack.c.l.b16 %v884
        %v1030 = vunpack.c.l.b16 %v885
        %v1031 = vunpack.c.l.b16 %v886
        %v1032 = vpack.c.b16 %v1019, %v1018
        %v1033 = vpack.c.b16 %v1021, %v1020
        %v1034 = vpack.c.b16 %v1023, %v1022
        %v1035 = vpack.c.b16 %v1025, %v1024
        %v1036 = vpack.c.b16 %v1027, %v1026
        %v1037 = vpack.c.b16 %v1029, %v1028
        %v1038 = vpack.c.b16 %v1031, %v1030
        %v1040 = vsel %vm938, %v1032, 0
        %v1043 = vsel %vm938, %v1033, 0
        %v1046 = vsel %vm938, %v1034, 0
        %v1049 = vsel %vm938, %v1035, 0
        %v1052 = vsel %vm938, %v1036, 0
        %v1055 = vsel %vm938, %v1037, 0
        %v1058 = vsel %vm938, %v1038, 0
        %1060 = vmatpush.bf16.msra.mxu0 0
        %1061 = vmatpush.bf16.msra.mxu0 0
        %1062 = vmatpush.bf16.msra.mxu0 0
        %1063 = vmatpush.bf16.msra.mxu0 0
        %1064 = vmatpush.bf16.msra.mxu0 0
        %1065 = vmatpush.bf16.msra.mxu0 0
        %1066 = vmatpush.bf16.msra.mxu0 0
        %1067 = vmatpush.bf16.msra.mxu0 %v887
        %1068 = vmatmul.bf16.gmra.mxu0 %v1040
        %v1069 = vpop.f32.mrf.mxu0
        %v1070 = vadd.f32 %v970, %v1069
        %v1071 = vpop.f32.mrf.mxu0
        %v1072 = vadd.f32 %v972, %v1071
        %1073 = vmatmul.bf16.gmra.mxu0 %v1043
        %v1074 = vpop.f32.mrf.mxu0
        %v1075 = vadd.f32 %v975, %v1074
        %v1076 = vpop.f32.mrf.mxu0
        %v1077 = vadd.f32 %v977, %v1076
        %1078 = vmatmul.bf16.gmra.mxu0 %v1046
        %v1079 = vpop.f32.mrf.mxu0
        %v1080 = vadd.f32 %v980, %v1079
        %v1081 = vpop.f32.mrf.mxu0
        %v1082 = vadd.f32 %v982, %v1081
        %1083 = vmatmul.bf16.gmra.mxu0 %v1049
        %v1084 = vpop.f32.mrf.mxu0
        %v1085 = vadd.f32 %v985, %v1084
        %v1086 = vpop.f32.mrf.mxu0
        %v1087 = vadd.f32 %v987, %v1086
        %1088 = vmatmul.bf16.gmra.mxu0 %v1052
        %v1089 = vpop.f32.mrf.mxu0
        %v1090 = vadd.f32 %v990, %v1089
        %v1091 = vpop.f32.mrf.mxu0
        %v1092 = vadd.f32 %v992, %v1091
        %1093 = vmatmul.bf16.gmra.mxu0 %v1055
        %v1094 = vpop.f32.mrf.mxu0
        %v1095 = vadd.f32 %v995, %v1094
        %v1096 = vpop.f32.mrf.mxu0
        %v1097 = vadd.f32 %v997, %v1096
        %1098 = vmatmul.bf16.gmra.mxu0 %v1058
        %v1099 = vpop.f32.mrf.mxu0
        %v1100 = vadd.f32 %v1000, %v1099
        %v1101 = vpop.f32.mrf.mxu0
        %v1102 = vadd.f32 %v1002, %v1101
        %1103 = vdwg.mxu0
        %v1104 = vmax.f32 %v1070, 0.0
        %v1105 = vmax.f32 %v1072, 0.0
        %v1106 = vmax.f32 %v1075, 0.0
        %v1107 = vmax.f32 %v1077, 0.0
        %v1108 = vmax.f32 %v1080, 0.0
        %v1109 = vmax.f32 %v1082, 0.0
        %v1110 = vmax.f32 %v1085, 0.0
        %v1111 = vmax.f32 %v1087, 0.0
        %v1112 = vmax.f32 %v1090, 0.0
        %v1113 = vmax.f32 %v1092, 0.0
        %v1114 = vmax.f32 %v1095, 0.0
        %v1115 = vmax.f32 %v1097, 0.0
        %v1116 = vmax.f32 %v1100, 0.0
        %v1117 = vmax.f32 %v1102, 0.0
        %s1118 = scalar_lea.vmem [#allocation5], 320
        %v1119 = vld [vmem:[%s1118] sm:$0xf]
        %v1120 = vld [vmem:[%s1118 + $0x4] sm:$0xf]
        %v1121 = vld [vmem:[%s1118 + $0x8] sm:$0xf]
        %v1122 = vld [vmem:[%s1118 + $0xc] sm:$0xf]
        %v1123 = vld [vmem:[%s1118 + $0x10] sm:$0xf]
        %v1124 = vld [vmem:[%s1118 + $0x14] sm:$0xf]
        %v1125 = vld [vmem:[%s1118 + $0x18] sm:$0xf]
        %v1126 = vld [vmem:[%s1118 + $0x1c] sm:$0xf]
        %v1127 = vld [vmem:[%s1118 + $0x20] sm:$0xf]
        %v1128 = vld [vmem:[%s1118 + $0x24] sm:$0xf]
        %v1129 = vld [vmem:[%s1118 + $0x28] sm:$0xf]
        %v1130 = vld [vmem:[%s1118 + $0x2c] sm:$0xf]
        %v1131 = vld [vmem:[%s1118 + $0x30] sm:$0xf]
        %v1132 = vld [vmem:[%s1118 + $0x34] sm:$0xf]
        %v1133 = vld [vmem:[%s1118 + $0x38] sm:$0xf]
        %v1134 = vld [vmem:[%s1118 + $0x3c] sm:$0xf]
        %v1135 = vpack.c.bf16 %v1105, %v1104
        %v1136 = vpack.c.bf16 %v1107, %v1106
        %v1137 = vpack.c.bf16 %v1109, %v1108
        %v1138 = vpack.c.bf16 %v1111, %v1110
        %v1139 = vpack.c.bf16 %v1113, %v1112
        %v1140 = vpack.c.bf16 %v1115, %v1114
        %v1141 = vpack.c.bf16 %v1117, %v1116
        %s1142 = scalar_lea.vmem %s5, 4
        %v1143 = vld [vmem:[%s1142] sm:$0x1]
        %v1145 = vperm.slane %v1143, 0
        %v1163 = vunpack.c.l.b16 %v1119
        %v1164 = vunpack.c.l.b16 %v1120
        %v1165 = vunpack.c.l.b16 %v1121
        %v1166 = vunpack.c.l.b16 %v1122
        %v1167 = vunpack.c.l.b16 %v1123
        %v1168 = vunpack.c.l.b16 %v1124
        %v1169 = vunpack.c.l.b16 %v1125
        %v1170 = vunpack.c.l.b16 %v1126
        %v1171 = vunpack.c.l.b16 %v1127
        %v1172 = vunpack.c.l.b16 %v1128
        %v1173 = vunpack.c.l.b16 %v1129
        %v1174 = vunpack.c.l.b16 %v1130
        %v1175 = vunpack.c.l.b16 %v1131
        %v1176 = vunpack.c.l.b16 %v1132
        %v1177 = vunpack.c.l.b16 %v1133
        %v1178 = vunpack.c.l.b16 %v1134
        %v1179 = vpack.c.b16 %v1164, %v1163
        %v1180 = vpack.c.b16 %v1166, %v1165
        %v1181 = vpack.c.b16 %v1168, %v1167
        %v1182 = vpack.c.b16 %v1170, %v1169
        %v1183 = vpack.c.b16 %v1172, %v1171
        %v1184 = vpack.c.b16 %v1174, %v1173
        %v1185 = vpack.c.b16 %v1176, %v1175
        %v1186 = vpack.c.b16 %v1178, %v1177
        %1195 = vmatpush.bf16.msra.mxu0 %v1186
        %1196 = vmatpush.bf16.msra.mxu0 %v1185
        %1197 = vmatpush.bf16.msra.mxu0 %v1184
        %1198 = vmatpush.bf16.msra.mxu0 %v1183
        %1199 = vmatpush.bf16.msra.mxu0 %v1182
        %1200 = vmatpush.bf16.msra.mxu0 %v1181
        %1201 = vmatpush.bf16.msra.mxu0 %v1180
        %1202 = vmatpush.bf16.msra.mxu0 %v1179
        %1203 = vmatmul.bf16.gmra.mxu0 %v1135
        %v1204 = vpop.f32.mrf.mxu0
        %v1205 = vadd.f32 %v1145, %v1204
        %v1206 = vpop.f32.mrf.mxu0
        %v1207 = vadd.f32 %v1145, %v1206
        %1208 = vmatmul.bf16.gmra.mxu0 %v1136
        %v1209 = vpop.f32.mrf.mxu0
        %v1210 = vadd.f32 %v1145, %v1209
        %v1211 = vpop.f32.mrf.mxu0
        %v1212 = vadd.f32 %v1145, %v1211
        %1213 = vmatmul.bf16.gmra.mxu0 %v1137
        %v1214 = vpop.f32.mrf.mxu0
        %v1215 = vadd.f32 %v1145, %v1214
        %v1216 = vpop.f32.mrf.mxu0
        %v1217 = vadd.f32 %v1145, %v1216
        %1218 = vmatmul.bf16.gmra.mxu0 %v1138
        %v1219 = vpop.f32.mrf.mxu0
        %v1220 = vadd.f32 %v1145, %v1219
        %v1221 = vpop.f32.mrf.mxu0
        %v1222 = vadd.f32 %v1145, %v1221
        %1223 = vmatmul.bf16.gmra.mxu0 %v1139
        %v1224 = vpop.f32.mrf.mxu0
        %v1225 = vadd.f32 %v1145, %v1224
        %v1226 = vpop.f32.mrf.mxu0
        %v1227 = vadd.f32 %v1145, %v1226
        %1228 = vmatmul.bf16.gmra.mxu0 %v1140
        %v1229 = vpop.f32.mrf.mxu0
        %v1230 = vadd.f32 %v1145, %v1229
        %v1231 = vpop.f32.mrf.mxu0
        %v1232 = vadd.f32 %v1145, %v1231
        %1233 = vmatmul.bf16.gmra.mxu0 %v1141
        %v1234 = vpop.f32.mrf.mxu0
        %v1235 = vadd.f32 %v1145, %v1234
        %v1236 = vpop.f32.mrf.mxu0
        %v1237 = vadd.f32 %v1145, %v1236
        %1238 = vdwg.mxu0
        %v1239 = vmax.f32 %v1205, 0.0
        %v1240 = vmax.f32 %v1207, 0.0
        %v1241 = vmax.f32 %v1210, 0.0
        %v1242 = vmax.f32 %v1212, 0.0
        %v1243 = vmax.f32 %v1215, 0.0
        %v1244 = vmax.f32 %v1217, 0.0
        %v1245 = vmax.f32 %v1220, 0.0
        %v1246 = vmax.f32 %v1222, 0.0
        %v1247 = vmax.f32 %v1225, 0.0
        %v1248 = vmax.f32 %v1227, 0.0
        %v1249 = vmax.f32 %v1230, 0.0
        %v1250 = vmax.f32 %v1232, 0.0
        %v1251 = vmax.f32 %v1235, 0.0
        %v1252 = vmax.f32 %v1237, 0.0
        %s1253 = scalar_lea.vmem [#allocation5], 384
        %v1254 = vld [vmem:[%s1253] sm:$0xf]
        %v1255 = vld [vmem:[%s1253 + $0x4] sm:$0xf]
        %v1256 = vld [vmem:[%s1253 + $0x8] sm:$0xf]
        %v1257 = vld [vmem:[%s1253 + $0xc] sm:$0xf]
        %v1258 = vld [vmem:[%s1253 + $0x10] sm:$0xf]
        %v1259 = vld [vmem:[%s1253 + $0x14] sm:$0xf]
        %v1260 = vld [vmem:[%s1253 + $0x18] sm:$0xf]
        %v1261 = vld [vmem:[%s1253 + $0x1c] sm:$0xf]
        %v1262 = vld [vmem:[%s1253 + $0x20] sm:$0xf]
        %v1263 = vld [vmem:[%s1253 + $0x24] sm:$0xf]
        %v1264 = vld [vmem:[%s1253 + $0x28] sm:$0xf]
        %v1265 = vld [vmem:[%s1253 + $0x2c] sm:$0xf]
        %v1266 = vld [vmem:[%s1253 + $0x30] sm:$0xf]
        %v1267 = vld [vmem:[%s1253 + $0x34] sm:$0xf]
        %v1268 = vld [vmem:[%s1253 + $0x38] sm:$0xf]
        %v1269 = vld [vmem:[%s1253 + $0x3c] sm:$0xf]
        %v1270 = vpack.c.bf16 %v1240, %v1239
        %v1271 = vpack.c.bf16 %v1242, %v1241
        %v1272 = vpack.c.bf16 %v1244, %v1243
        %v1273 = vpack.c.bf16 %v1246, %v1245
        %v1274 = vpack.c.bf16 %v1248, %v1247
        %v1275 = vpack.c.bf16 %v1250, %v1249
        %v1276 = vpack.c.bf16 %v1252, %v1251
        %s1277 = scalar_lea.vmem %s5, 5
        %v1278 = vld [vmem:[%s1277] sm:$0x1]
        %v1280 = vperm.slane %v1278, 0
        %v1298 = vunpack.c.l.b16 %v1254
        %v1299 = vunpack.c.l.b16 %v1255
        %v1300 = vunpack.c.l.b16 %v1256
        %v1301 = vunpack.c.l.b16 %v1257
        %v1302 = vunpack.c.l.b16 %v1258
        %v1303 = vunpack.c.l.b16 %v1259
        %v1304 = vunpack.c.l.b16 %v1260
        %v1305 = vunpack.c.l.b16 %v1261
        %v1306 = vunpack.c.l.b16 %v1262
        %v1307 = vunpack.c.l.b16 %v1263
        %v1308 = vunpack.c.l.b16 %v1264
        %v1309 = vunpack.c.l.b16 %v1265
        %v1310 = vunpack.c.l.b16 %v1266
        %v1311 = vunpack.c.l.b16 %v1267
        %v1312 = vunpack.c.l.b16 %v1268
        %v1313 = vunpack.c.l.b16 %v1269
        %v1314 = vpack.c.b16 %v1299, %v1298
        %v1315 = vpack.c.b16 %v1301, %v1300
        %v1316 = vpack.c.b16 %v1303, %v1302
        %v1317 = vpack.c.b16 %v1305, %v1304
        %v1318 = vpack.c.b16 %v1307, %v1306
        %v1319 = vpack.c.b16 %v1309, %v1308
        %v1320 = vpack.c.b16 %v1311, %v1310
        %v1321 = vpack.c.b16 %v1313, %v1312
        %1330 = vmatpush.bf16.msra.mxu0 %v1321
        %1331 = vmatpush.bf16.msra.mxu0 %v1320
        %1332 = vmatpush.bf16.msra.mxu0 %v1319
        %1333 = vmatpush.bf16.msra.mxu0 %v1318
        %1334 = vmatpush.bf16.msra.mxu0 %v1317
        %1335 = vmatpush.bf16.msra.mxu0 %v1316
        %1336 = vmatpush.bf16.msra.mxu0 %v1315
        %1337 = vmatpush.bf16.msra.mxu0 %v1314
        %1338 = vmatmul.bf16.gmra.mxu0 %v1270
        %v1339 = vpop.f32.mrf.mxu0
        %v1340 = vadd.f32 %v1280, %v1339
        %v1341 = vpop.f32.mrf.mxu0
        %v1342 = vadd.f32 %v1280, %v1341
        %1343 = vmatmul.bf16.gmra.mxu0 %v1271
        %v1344 = vpop.f32.mrf.mxu0
        %v1345 = vadd.f32 %v1280, %v1344
        %v1346 = vpop.f32.mrf.mxu0
        %v1347 = vadd.f32 %v1280, %v1346
        %1348 = vmatmul.bf16.gmra.mxu0 %v1272
        %v1349 = vpop.f32.mrf.mxu0
        %v1350 = vadd.f32 %v1280, %v1349
        %v1351 = vpop.f32.mrf.mxu0
        %v1352 = vadd.f32 %v1280, %v1351
        %1353 = vmatmul.bf16.gmra.mxu0 %v1273
        %v1354 = vpop.f32.mrf.mxu0
        %v1355 = vadd.f32 %v1280, %v1354
        %v1356 = vpop.f32.mrf.mxu0
        %v1357 = vadd.f32 %v1280, %v1356
        %1358 = vmatmul.bf16.gmra.mxu0 %v1274
        %v1359 = vpop.f32.mrf.mxu0
        %v1360 = vadd.f32 %v1280, %v1359
        %v1361 = vpop.f32.mrf.mxu0
        %v1362 = vadd.f32 %v1280, %v1361
        %1363 = vmatmul.bf16.gmra.mxu0 %v1275
        %v1364 = vpop.f32.mrf.mxu0
        %v1365 = vadd.f32 %v1280, %v1364
        %v1366 = vpop.f32.mrf.mxu0
        %v1367 = vadd.f32 %v1280, %v1366
        %1368 = vmatmul.bf16.gmra.mxu0 %v1276
        %v1369 = vpop.f32.mrf.mxu0
        %v1370 = vadd.f32 %v1280, %v1369
        %v1371 = vpop.f32.mrf.mxu0
        %v1372 = vadd.f32 %v1280, %v1371
        %1373 = vdwg.mxu0
        %v1374 = vld [vmem:[%s3] sm:$0xf]
        %v1375 = vld [vmem:[%s3 + $0x4] sm:$0xf]
        %v1376 = vpack.c.bf16 %v1342, %v1340
        %v1377 = vpack.c.bf16 %v1347, %v1345
        %v1378 = vpack.c.bf16 %v1352, %v1350
        %v1379 = vpack.c.bf16 %v1357, %v1355
        %v1380 = vpack.c.bf16 %v1362, %v1360
        %v1381 = vpack.c.bf16 %v1367, %v1365
        %v1382 = vpack.c.bf16 %v1372, %v1370
        %v1385 = vunpack.c.l.b16 %v1374
        %v1386 = vunpack.c.l.b16 %v1375
        %v1387 = vpack.c.b16 %v1386, %v1385
        %vm1388 = vcmask 916480
        %v1390 = vsel %vm1388, %v1387, 0
        %1392 = vmatpush.bf16.msra.mxu0 0
        %1393 = vmatpush.bf16.msra.mxu0 %v1382
        %1394 = vmatpush.bf16.msra.mxu0 %v1381
        %1395 = vmatpush.bf16.msra.mxu0 %v1380
        %1396 = vmatpush.bf16.msra.mxu0 %v1379
        %1397 = vmatpush.bf16.msra.mxu0 %v1378
        %1398 = vmatpush.bf16.msra.mxu0 %v1377
        %1399 = vmatpush.bf16.msra.mxu0 %v1376
        %1400 = vmatmul.bf16.gmra.mxu0 %v1390
        %v1401 = vpop.f32.mrf.mxu0
        %v1402 = vadd.f32 0.0, %v1401
        %v1403 = vpop.f32.mrf.mxu0
        %v1404 = vadd.f32 0.0, %v1403
        %1405 = vdwg.mxu0
        %s1406 = scalar_lea.vmem [#allocation5], 448
        %v1407 = vld [vmem:[%s1406] sm:$0xf]
        %v1408 = vld [vmem:[%s1406 + $0x4] sm:$0xf]
        %v1409 = vld [vmem:[%s1406 + $0x8] sm:$0xf]
        %v1410 = vld [vmem:[%s1406 + $0xc] sm:$0xf]
        %v1411 = vld [vmem:[%s1406 + $0x10] sm:$0xf]
        %v1412 = vld [vmem:[%s1406 + $0x14] sm:$0xf]
        %v1413 = vld [vmem:[%s1406 + $0x18] sm:$0xf]
        %v1414 = vld [vmem:[%s1406 + $0x1c] sm:$0xf]
        %v1415 = vld [vmem:[%s1406 + $0x20] sm:$0xf]
        %v1416 = vld [vmem:[%s1406 + $0x24] sm:$0xf]
        %v1417 = vld [vmem:[%s1406 + $0x28] sm:$0xf]
        %v1418 = vld [vmem:[%s1406 + $0x2c] sm:$0xf]
        %v1419 = vld [vmem:[%s1406 + $0x30] sm:$0xf]
        %v1420 = vld [vmem:[%s1406 + $0x34] sm:$0xf]
        %v1421 = vld [vmem:[%s1406 + $0x38] sm:$0xf]
        %v1422 = vld [vmem:[%s1406 + $0x3c] sm:$0xf]
        %v1423 = vpack.c.bf16 %v704, %v703
        %s1424 = scalar_lea.vmem [#allocation5], 512
        %v1425 = vld [vmem:[%s1424] sm:$0xf]
        %v1426 = vld [vmem:[%s1424 + $0x4] sm:$0xf]
        %v1427 = vld [vmem:[%s1424 + $0x8] sm:$0xf]
        %v1428 = vld [vmem:[%s1424 + $0xc] sm:$0xf]
        %v1429 = vld [vmem:[%s1424 + $0x10] sm:$0xf]
        %v1430 = vld [vmem:[%s1424 + $0x14] sm:$0xf]
        %v1431 = vld [vmem:[%s1424 + $0x18] sm:$0xf]
        %v1432 = vld [vmem:[%s1424 + $0x1c] sm:$0xf]
        %v1433 = vld [vmem:[%s1424 + $0x20] sm:$0xf]
        %v1434 = vld [vmem:[%s1424 + $0x24] sm:$0xf]
        %v1435 = vld [vmem:[%s1424 + $0x28] sm:$0xf]
        %v1436 = vld [vmem:[%s1424 + $0x2c] sm:$0xf]
        %v1437 = vld [vmem:[%s1424 + $0x30] sm:$0xf]
        %v1438 = vld [vmem:[%s1424 + $0x34] sm:$0xf]
        %v1439 = vld [vmem:[%s1424 + $0x38] sm:$0xf]
        %v1440 = vld [vmem:[%s1424 + $0x3c] sm:$0xf]
        %v1441 = vpack.c.bf16 %v1404, %v1402
        %v1458 = vunpack.c.l.b16 %v1425
        %v1459 = vunpack.c.l.b16 %v1426
        %v1460 = vunpack.c.l.b16 %v1427
        %v1461 = vunpack.c.l.b16 %v1428
        %v1462 = vunpack.c.l.b16 %v1429
        %v1463 = vunpack.c.l.b16 %v1430
        %v1464 = vunpack.c.l.b16 %v1431
        %v1465 = vunpack.c.l.b16 %v1432
        %v1466 = vunpack.c.l.b16 %v1433
        %v1467 = vunpack.c.l.b16 %v1434
        %v1468 = vunpack.c.l.b16 %v1435
        %v1469 = vunpack.c.l.b16 %v1436
        %v1470 = vunpack.c.l.b16 %v1437
        %v1471 = vunpack.c.l.b16 %v1438
        %v1472 = vunpack.c.l.b16 %v1439
        %v1473 = vunpack.c.l.b16 %v1440
        %v1474 = vpack.c.b16 %v1459, %v1458
        %v1475 = vpack.c.b16 %v1461, %v1460
        %v1476 = vpack.c.b16 %v1463, %v1462
        %v1477 = vpack.c.b16 %v1465, %v1464
        %v1478 = vpack.c.b16 %v1467, %v1466
        %v1479 = vpack.c.b16 %v1469, %v1468
        %v1480 = vpack.c.b16 %v1471, %v1470
        %v1481 = vpack.c.b16 %v1473, %v1472
        %1490 = vmatpush.bf16.msra.mxu0 %v1481
        %1491 = vmatpush.bf16.msra.mxu0 %v1480
        %1492 = vmatpush.bf16.msra.mxu0 %v1479
        %1493 = vmatpush.bf16.msra.mxu0 %v1478
        %1494 = vmatpush.bf16.msra.mxu0 %v1477
        %1495 = vmatpush.bf16.msra.mxu0 %v1476
        %1496 = vmatpush.bf16.msra.mxu0 %v1475
        %1497 = vmatpush.bf16.msra.mxu0 %v1474
        %1498 = vmatmul.bf16.gmra.mxu0 %v1441
        %v1499 = vpop.f32.mrf.mxu0
        %v1500 = vadd.f32 0.0, %v1499
        %v1501 = vpop.f32.mrf.mxu0
        %v1502 = vadd.f32 0.0, %v1501
        %1503 = vdwg.mxu0
        %v1520 = vunpack.c.l.b16 %v1407
        %v1521 = vunpack.c.l.b16 %v1408
        %v1522 = vunpack.c.l.b16 %v1409
        %v1523 = vunpack.c.l.b16 %v1410
        %v1524 = vunpack.c.l.b16 %v1411
        %v1525 = vunpack.c.l.b16 %v1412
        %v1526 = vunpack.c.l.b16 %v1413
        %v1527 = vunpack.c.l.b16 %v1414
        %v1528 = vunpack.c.l.b16 %v1415
        %v1529 = vunpack.c.l.b16 %v1416
        %v1530 = vunpack.c.l.b16 %v1417
        %v1531 = vunpack.c.l.b16 %v1418
        %v1532 = vunpack.c.l.b16 %v1419
        %v1533 = vunpack.c.l.b16 %v1420
        %v1534 = vunpack.c.l.b16 %v1421
        %v1535 = vunpack.c.l.b16 %v1422
        %v1536 = vpack.c.b16 %v1521, %v1520
        %v1537 = vpack.c.b16 %v1523, %v1522
        %v1538 = vpack.c.b16 %v1525, %v1524
        %v1539 = vpack.c.b16 %v1527, %v1526
        %v1540 = vpack.c.b16 %v1529, %v1528
        %v1541 = vpack.c.b16 %v1531, %v1530
        %v1542 = vpack.c.b16 %v1533, %v1532
        %v1543 = vpack.c.b16 %v1535, %v1534
        %1552 = vmatpush.bf16.msra.mxu0 %v1543
        %1553 = vmatpush.bf16.msra.mxu0 %v1542
        %1554 = vmatpush.bf16.msra.mxu0 %v1541
        %1555 = vmatpush.bf16.msra.mxu0 %v1540
        %1556 = vmatpush.bf16.msra.mxu0 %v1539
        %1557 = vmatpush.bf16.msra.mxu0 %v1538
        %1558 = vmatpush.bf16.msra.mxu0 %v1537
        %1559 = vmatpush.bf16.msra.mxu0 %v1536
        %1560 = vmatmul.bf16.gmra.mxu0 %v1423
        %v1561 = vpop.f32.mrf.mxu0
        %v1562 = vadd.f32 %v1500, %v1561
        %v1563 = vpop.f32.mrf.mxu0
        %v1564 = vadd.f32 %v1502, %v1563
        %1565 = vdwg.mxu0
        %s1566 = scalar_lea.vmem %s5, 6
        %v1567 = vld [vmem:[%s1566] sm:$0x1]
        %v1569 = vperm.slane %v1567, 0
        %v1571 = vadd.f32 %v1562, %v1569
        %v1572 = vadd.f32 %v1564, %v1569
        %v1573 = vmax.f32 %v1571, 0.0
        %v1574 = vmax.f32 %v1572, 0.0
        %s1575 = scalar_lea.vmem [#allocation5], 576
        %v1576 = vld [vmem:[%s1575] sm:$0xf]
        %v1577 = vld [vmem:[%s1575 + $0x4] sm:$0xf]
        %v1578 = vld [vmem:[%s1575 + $0x8] sm:$0xf]
        %v1579 = vld [vmem:[%s1575 + $0xc] sm:$0xf]
        %v1580 = vld [vmem:[%s1575 + $0x10] sm:$0xf]
        %v1581 = vld [vmem:[%s1575 + $0x14] sm:$0xf]
        %v1582 = vld [vmem:[%s1575 + $0x18] sm:$0xf]
        %v1583 = vld [vmem:[%s1575 + $0x1c] sm:$0xf]
        %v1584 = vld [vmem:[%s1575 + $0x20] sm:$0xf]
        %v1585 = vld [vmem:[%s1575 + $0x24] sm:$0xf]
        %v1586 = vld [vmem:[%s1575 + $0x28] sm:$0xf]
        %v1587 = vld [vmem:[%s1575 + $0x2c] sm:$0xf]
        %v1588 = vld [vmem:[%s1575 + $0x30] sm:$0xf]
        %v1589 = vld [vmem:[%s1575 + $0x34] sm:$0xf]
        %v1590 = vld [vmem:[%s1575 + $0x38] sm:$0xf]
        %v1591 = vld [vmem:[%s1575 + $0x3c] sm:$0xf]
        %v1592 = vpack.c.bf16 %v1574, %v1573
        %s1593 = scalar_lea.vmem %s5, 7
        %v1594 = vld [vmem:[%s1593] sm:$0x1]
        %v1596 = vperm.slane %v1594, 0
        %v1614 = vunpack.c.l.b16 %v1576
        %v1615 = vunpack.c.l.b16 %v1577
        %v1616 = vunpack.c.l.b16 %v1578
        %v1617 = vunpack.c.l.b16 %v1579
        %v1618 = vunpack.c.l.b16 %v1580
        %v1619 = vunpack.c.l.b16 %v1581
        %v1620 = vunpack.c.l.b16 %v1582
        %v1621 = vunpack.c.l.b16 %v1583
        %v1622 = vunpack.c.l.b16 %v1584
        %v1623 = vunpack.c.l.b16 %v1585
        %v1624 = vunpack.c.l.b16 %v1586
        %v1625 = vunpack.c.l.b16 %v1587
        %v1626 = vunpack.c.l.b16 %v1588
        %v1627 = vunpack.c.l.b16 %v1589
        %v1628 = vunpack.c.l.b16 %v1590
        %v1629 = vunpack.c.l.b16 %v1591
        %v1630 = vpack.c.b16 %v1615, %v1614
        %v1631 = vpack.c.b16 %v1617, %v1616
        %v1632 = vpack.c.b16 %v1619, %v1618
        %v1633 = vpack.c.b16 %v1621, %v1620
        %v1634 = vpack.c.b16 %v1623, %v1622
        %v1635 = vpack.c.b16 %v1625, %v1624
        %v1636 = vpack.c.b16 %v1627, %v1626
        %v1637 = vpack.c.b16 %v1629, %v1628
        %1646 = vmatpush.bf16.msra.mxu0 %v1637
        %1647 = vmatpush.bf16.msra.mxu0 %v1636
        %1648 = vmatpush.bf16.msra.mxu0 %v1635
        %1649 = vmatpush.bf16.msra.mxu0 %v1634
        %1650 = vmatpush.bf16.msra.mxu0 %v1633
        %1651 = vmatpush.bf16.msra.mxu0 %v1632
        %1652 = vmatpush.bf16.msra.mxu0 %v1631
        %1653 = vmatpush.bf16.msra.mxu0 %v1630
        %1654 = vmatmul.bf16.gmra.mxu0 %v1592
        %v1655 = vpop.f32.mrf.mxu0
        %v1656 = vadd.f32 %v1596, %v1655
        %v1657 = vpop.f32.mrf.mxu0
        %v1658 = vadd.f32 %v1596, %v1657
        %1659 = vdwg.mxu0
        %v1660 = vmax.f32 %v1656, 0.0
        %v1661 = vmax.f32 %v1658, 0.0
        %s1662 = scalar_lea.vmem [#allocation5], 640
        %v1663 = vld [vmem:[%s1662] sm:$0xf]
        %v1664 = vld [vmem:[%s1662 + $0x4] sm:$0xf]
        %v1665 = vld [vmem:[%s1662 + $0x8] sm:$0xf]
        %v1666 = vld [vmem:[%s1662 + $0xc] sm:$0xf]
        %v1667 = vld [vmem:[%s1662 + $0x10] sm:$0xf]
        %v1668 = vld [vmem:[%s1662 + $0x14] sm:$0xf]
        %v1669 = vld [vmem:[%s1662 + $0x18] sm:$0xf]
        %v1670 = vld [vmem:[%s1662 + $0x1c] sm:$0xf]
        %v1671 = vld [vmem:[%s1662 + $0x20] sm:$0xf]
        %v1672 = vld [vmem:[%s1662 + $0x24] sm:$0xf]
        %v1673 = vld [vmem:[%s1662 + $0x28] sm:$0xf]
        %v1674 = vld [vmem:[%s1662 + $0x2c] sm:$0xf]
        %v1675 = vld [vmem:[%s1662 + $0x30] sm:$0xf]
        %v1676 = vld [vmem:[%s1662 + $0x34] sm:$0xf]
        %v1677 = vld [vmem:[%s1662 + $0x38] sm:$0xf]
        %v1678 = vld [vmem:[%s1662 + $0x3c] sm:$0xf]
        %v1679 = vpack.c.bf16 %v1661, %v1660
        %s1680 = scalar_lea.vmem %s5, 8
        %v1681 = vld [vmem:[%s1680] sm:$0x1]
        %v1683 = vperm.slane %v1681, 0
        %v1701 = vunpack.c.l.b16 %v1663
        %v1702 = vunpack.c.l.b16 %v1664
        %v1703 = vunpack.c.l.b16 %v1665
        %v1704 = vunpack.c.l.b16 %v1666
        %v1705 = vunpack.c.l.b16 %v1667
        %v1706 = vunpack.c.l.b16 %v1668
        %v1707 = vunpack.c.l.b16 %v1669
        %v1708 = vunpack.c.l.b16 %v1670
        %v1709 = vunpack.c.l.b16 %v1671
        %v1710 = vunpack.c.l.b16 %v1672
        %v1711 = vunpack.c.l.b16 %v1673
        %v1712 = vunpack.c.l.b16 %v1674
        %v1713 = vunpack.c.l.b16 %v1675
        %v1714 = vunpack.c.l.b16 %v1676
        %v1715 = vunpack.c.l.b16 %v1677
        %v1716 = vunpack.c.l.b16 %v1678
        %v1717 = vpack.c.b16 %v1702, %v1701
        %v1718 = vpack.c.b16 %v1704, %v1703
        %v1719 = vpack.c.b16 %v1706, %v1705
        %v1720 = vpack.c.b16 %v1708, %v1707
        %v1721 = vpack.c.b16 %v1710, %v1709
        %v1722 = vpack.c.b16 %v1712, %v1711
        %v1723 = vpack.c.b16 %v1714, %v1713
        %v1724 = vpack.c.b16 %v1716, %v1715
        %1733 = vmatpush.bf16.msra.mxu0 %v1724
        %1734 = vmatpush.bf16.msra.mxu0 %v1723
        %1735 = vmatpush.bf16.msra.mxu0 %v1722
        %1736 = vmatpush.bf16.msra.mxu0 %v1721
        %1737 = vmatpush.bf16.msra.mxu0 %v1720
        %1738 = vmatpush.bf16.msra.mxu0 %v1719
        %1739 = vmatpush.bf16.msra.mxu0 %v1718
        %1740 = vmatpush.bf16.msra.mxu0 %v1717
        %1741 = vmatmul.bf16.gmra.mxu0 %v1679
        %v1742 = vpop.f32.mrf.mxu0
        %v1743 = vadd.f32 %v1683, %v1742
        %v1744 = vpop.f32.mrf.mxu0
        %v1745 = vadd.f32 %v1683, %v1744
        %1746 = vdwg.mxu0
        %v1747 = vld [vmem:[%s6] sm:$0xff]
        %v1748 = vld [vmem:[%s6 + $0x8] sm:$0xff]
        %v1749 = vld [vmem:[%s6 + $0x10] sm:$0xff]
        %v1750 = vld [vmem:[%s6 + $0x18] sm:$0xff]
        %v1751 = vld [vmem:[%s6 + $0x20] sm:$0xff]
        %v1752 = vld [vmem:[%s6 + $0x28] sm:$0xff]
        %v1753 = vld [vmem:[%s6 + $0x30] sm:$0xff]
        %v1754 = vld [vmem:[%s6 + $0x38] sm:$0xff]
        %v1755 = vld [vmem:[%s6 + $0x40] sm:$0xff]
        %v1756 = vld [vmem:[%s6 + $0x48] sm:$0xff]
        %v1757 = vld [vmem:[%s6 + $0x50] sm:$0xff]
        %v1758 = vld [vmem:[%s6 + $0x58] sm:$0xff]
        %v1759 = vld [vmem:[%s6 + $0x60] sm:$0xff]
        %v1760 = vld [vmem:[%s6 + $0x68] sm:$0xff]
        %v1761 = vld [vmem:[%s6 + $0x70] sm:$0xff]
        %v1762 = vld [vmem:[%s6 + $0x78] sm:$0xff]
        %v1763 = vld [vmem:[%s6 + $0x80] sm:$0xff]
        %v1764 = vld [vmem:[%s6 + $0x88] sm:$0xff]
        %v1765 = vld [vmem:[%s6 + $0x90] sm:$0xff]
        %v1766 = vld [vmem:[%s6 + $0x98] sm:$0xff]
        %v1767 = vld [vmem:[%s6 + $0xa0] sm:$0xff]
        %v1768 = vld [vmem:[%s6 + $0xa8] sm:$0xff]
        %v1769 = vld [vmem:[%s6 + $0xb0] sm:$0xff]
        %v1770 = vld [vmem:[%s6 + $0xb8] sm:$0xff]
        %v1771 = vld [vmem:[%s6 + $0xc0] sm:$0xff]
        %v1772 = vld [vmem:[%s6 + $0xc8] sm:$0xff]
        %v1773 = vld [vmem:[%s6 + $0xd0] sm:$0xff]
        %v1774 = vld [vmem:[%s6 + $0xd8] sm:$0xff]
        %v1775 = vld [vmem:[%s6 + $0xe0] sm:$0xff]
        %v1776 = vld [vmem:[%s6 + $0xe8] sm:$0xff]
        %v1777 = vld [vmem:[%s6 + $0xf0] sm:$0xff]
        %v1778 = vld [vmem:[%s6 + $0xf8] sm:$0xff]
        %v1779 = vpack.c.bf16 %v1745, %v1743
        %v1780 = vld [vmem:[#allocation8] sm:$0xff]
        %v1781 = vld [vmem:[#allocation8 + $0x8] sm:$0xff]
        %v1782 = vld [vmem:[#allocation8 + $0x10] sm:$0xff]
        %v1783 = vld [vmem:[#allocation8 + $0x18] sm:$0xff]
        %v1784 = vld [vmem:[#allocation8 + $0x20] sm:$0xff]
        %v1785 = vld [vmem:[#allocation8 + $0x28] sm:$0xff]
        %v1786 = vld [vmem:[#allocation8 + $0x30] sm:$0xff]
        %v1787 = vld [vmem:[#allocation8 + $0x38] sm:$0xff]
        %v1788 = vld [vmem:[#allocation8 + $0x40] sm:$0xff]
        %v1789 = vld [vmem:[#allocation8 + $0x48] sm:$0xff]
        %v1790 = vld [vmem:[#allocation8 + $0x50] sm:$0xff]
        %v1791 = vld [vmem:[#allocation8 + $0x58] sm:$0xff]
        %v1792 = vld [vmem:[#allocation8 + $0x60] sm:$0xff]
        %v1793 = vld [vmem:[#allocation8 + $0x68] sm:$0xff]
        %v1794 = vld [vmem:[#allocation8 + $0x70] sm:$0xff]
        %v1795 = vld [vmem:[#allocation8 + $0x78] sm:$0xff]
        %v1796 = vld [vmem:[#allocation8 + $0x80] sm:$0xff]
        %v1797 = vld [vmem:[#allocation8 + $0x88] sm:$0xff]
        %v1798 = vld [vmem:[#allocation8 + $0x90] sm:$0xff]
        %v1799 = vld [vmem:[#allocation8 + $0x98] sm:$0xff]
        %v1800 = vld [vmem:[#allocation8 + $0xa0] sm:$0xff]
        %v1801 = vld [vmem:[#allocation8 + $0xa8] sm:$0xff]
        %v1802 = vld [vmem:[#allocation8 + $0xb0] sm:$0xff]
        %v1803 = vld [vmem:[#allocation8 + $0xb8] sm:$0xff]
        %v1804 = vld [vmem:[#allocation8 + $0xc0] sm:$0xff]
        %v1805 = vld [vmem:[#allocation8 + $0xc8] sm:$0xff]
        %v1806 = vld [vmem:[#allocation8 + $0xd0] sm:$0xff]
        %v1807 = vld [vmem:[#allocation8 + $0xd8] sm:$0xff]
        %v1808 = vld [vmem:[#allocation8 + $0xe0] sm:$0xff]
        %v1809 = vld [vmem:[#allocation8 + $0xe8] sm:$0xff]
        %v1810 = vld [vmem:[#allocation8 + $0xf0] sm:$0xff]
        %v1811 = vld [vmem:[#allocation8 + $0xf8] sm:$0xff]
        %v1844 = vunpack.c.l.b16 %v1780
        %v1845 = vunpack.c.h.b16 %v1780
        %v1846 = vunpack.c.l.b16 %v1781
        %v1847 = vunpack.c.h.b16 %v1781
        %v1848 = vunpack.c.l.b16 %v1782
        %v1849 = vunpack.c.h.b16 %v1782
        %v1850 = vunpack.c.l.b16 %v1783
        %v1851 = vunpack.c.h.b16 %v1783
        %v1852 = vunpack.c.l.b16 %v1784
        %v1853 = vunpack.c.h.b16 %v1784
        %v1854 = vunpack.c.l.b16 %v1785
        %v1855 = vunpack.c.h.b16 %v1785
        %v1856 = vunpack.c.l.b16 %v1786
        %v1857 = vunpack.c.h.b16 %v1786
        %v1858 = vunpack.c.l.b16 %v1787
        %v1859 = vunpack.c.h.b16 %v1787
        %v1860 = vunpack.c.l.b16 %v1788
        %v1861 = vunpack.c.h.b16 %v1788
        %v1862 = vunpack.c.l.b16 %v1789
        %v1863 = vunpack.c.h.b16 %v1789
        %v1864 = vunpack.c.l.b16 %v1790
        %v1865 = vunpack.c.h.b16 %v1790
        %v1866 = vunpack.c.l.b16 %v1791
        %v1867 = vunpack.c.h.b16 %v1791
        %v1868 = vunpack.c.l.b16 %v1792
        %v1869 = vunpack.c.h.b16 %v1792
        %v1870 = vunpack.c.l.b16 %v1793
        %v1871 = vunpack.c.h.b16 %v1793
        %v1872 = vunpack.c.l.b16 %v1794
        %v1873 = vunpack.c.h.b16 %v1794
        %v1874 = vunpack.c.l.b16 %v1795
        %v1875 = vunpack.c.h.b16 %v1795
        %v1876 = vunpack.c.l.b16 %v1796
        %v1877 = vunpack.c.h.b16 %v1796
        %v1878 = vunpack.c.l.b16 %v1797
        %v1879 = vunpack.c.h.b16 %v1797
        %v1880 = vunpack.c.l.b16 %v1798
        %v1881 = vunpack.c.h.b16 %v1798
        %v1882 = vunpack.c.l.b16 %v1799
        %v1883 = vunpack.c.h.b16 %v1799
        %v1884 = vunpack.c.l.b16 %v1800
        %v1885 = vunpack.c.h.b16 %v1800
        %v1886 = vunpack.c.l.b16 %v1801
        %v1887 = vunpack.c.h.b16 %v1801
        %v1888 = vunpack.c.l.b16 %v1802
        %v1889 = vunpack.c.h.b16 %v1802
        %v1890 = vunpack.c.l.b16 %v1803
        %v1891 = vunpack.c.h.b16 %v1803
        %v1892 = vunpack.c.l.b16 %v1804
        %v1893 = vunpack.c.h.b16 %v1804
        %v1894 = vunpack.c.l.b16 %v1805
        %v1895 = vunpack.c.h.b16 %v1805
        %v1896 = vunpack.c.l.b16 %v1806
        %v1897 = vunpack.c.h.b16 %v1806
        %v1898 = vunpack.c.l.b16 %v1807
        %v1899 = vunpack.c.h.b16 %v1807
        %v1900 = vunpack.c.l.b16 %v1808
        %v1901 = vunpack.c.h.b16 %v1808
        %v1902 = vunpack.c.l.b16 %v1809
        %v1903 = vunpack.c.h.b16 %v1809
        %v1904 = vunpack.c.l.b16 %v1810
        %v1905 = vunpack.c.h.b16 %v1810
        %v1906 = vunpack.c.l.b16 %v1811
        %v1907 = vunpack.c.h.b16 %v1811
        %v1908 = vpack.c.b16 %v1848, %v1844
        %v1909 = vpack.c.b16 %v1849, %v1845
        %v1910 = vpack.c.b16 %v1850, %v1846
        %v1911 = vpack.c.b16 %v1851, %v1847
        %v1912 = vpack.c.b16 %v1856, %v1852
        %v1913 = vpack.c.b16 %v1857, %v1853
        %v1914 = vpack.c.b16 %v1858, %v1854
        %v1915 = vpack.c.b16 %v1859, %v1855
        %v1916 = vpack.c.b16 %v1864, %v1860
        %v1917 = vpack.c.b16 %v1865, %v1861
        %v1918 = vpack.c.b16 %v1866, %v1862
        %v1919 = vpack.c.b16 %v1867, %v1863
        %v1920 = vpack.c.b16 %v1872, %v1868
        %v1921 = vpack.c.b16 %v1873, %v1869
        %v1922 = vpack.c.b16 %v1874, %v1870
        %v1923 = vpack.c.b16 %v1875, %v1871
        %v1924 = vpack.c.b16 %v1880, %v1876
        %v1925 = vpack.c.b16 %v1881, %v1877
        %v1926 = vpack.c.b16 %v1882, %v1878
        %v1927 = vpack.c.b16 %v1883, %v1879
        %v1928 = vpack.c.b16 %v1888, %v1884
        %v1929 = vpack.c.b16 %v1889, %v1885
        %v1930 = vpack.c.b16 %v1890, %v1886
        %v1931 = vpack.c.b16 %v1891, %v1887
        %v1932 = vpack.c.b16 %v1896, %v1892
        %v1933 = vpack.c.b16 %v1897, %v1893
        %v1934 = vpack.c.b16 %v1898, %v1894
        %v1935 = vpack.c.b16 %v1899, %v1895
        %v1936 = vpack.c.b16 %v1904, %v1900
        %v1937 = vpack.c.b16 %v1905, %v1901
        %v1938 = vpack.c.b16 %v1906, %v1902
        %v1939 = vpack.c.b16 %v1907, %v1903
        %1972 = vmatpush.bf16.msra.mxu0 %v1936
        %1973 = vmatpush.bf16.msra.mxu0 %v1932
        %1974 = vmatpush.bf16.msra.mxu0 %v1928
        %1975 = vmatpush.bf16.msra.mxu0 %v1924
        %1976 = vmatpush.bf16.msra.mxu0 %v1920
        %1977 = vmatpush.bf16.msra.mxu0 %v1916
        %1978 = vmatpush.bf16.msra.mxu0 %v1912
        %1979 = vmatpush.bf16.msra.mxu0 %v1908
        %1980 = vmatmul.bf16.gmra.mxu0 %v726
        %v1981 = vpop.f32.mrf.mxu0
        %v1982 = vadd.f32 0.0, %v1981
        %v1983 = vpop.f32.mrf.mxu0
        %v1984 = vadd.f32 0.0, %v1983
        %1985 = vdwg.mxu0
        %1986 = vmatpush.bf16.msra.mxu0 %v1937
        %1987 = vmatpush.bf16.msra.mxu0 %v1933
        %1988 = vmatpush.bf16.msra.mxu0 %v1929
        %1989 = vmatpush.bf16.msra.mxu0 %v1925
        %1990 = vmatpush.bf16.msra.mxu0 %v1921
        %1991 = vmatpush.bf16.msra.mxu0 %v1917
        %1992 = vmatpush.bf16.msra.mxu0 %v1913
        %1993 = vmatpush.bf16.msra.mxu0 %v1909
        %1994 = vmatmul.bf16.gmra.mxu0 %v726
        %v1995 = vpop.f32.mrf.mxu0
        %v1996 = vadd.f32 0.0, %v1995
        %v1997 = vpop.f32.mrf.mxu0
        %v1998 = vadd.f32 0.0, %v1997
        %1999 = vdwg.mxu0
        %2000 = vmatpush.bf16.msra.mxu0 %v1938
        %2001 = vmatpush.bf16.msra.mxu0 %v1934
        %2002 = vmatpush.bf16.msra.mxu0 %v1930
        %2003 = vmatpush.bf16.msra.mxu0 %v1926
        %2004 = vmatpush.bf16.msra.mxu0 %v1922
        %2005 = vmatpush.bf16.msra.mxu0 %v1918
        %2006 = vmatpush.bf16.msra.mxu0 %v1914
        %2007 = vmatpush.bf16.msra.mxu0 %v1910
        %2008 = vmatmul.bf16.gmra.mxu0 %v726
        %v2009 = vpop.f32.mrf.mxu0
        %v2010 = vadd.f32 0.0, %v2009
        %v2011 = vpop.f32.mrf.mxu0
        %v2012 = vadd.f32 0.0, %v2011
        %2013 = vdwg.mxu0
        %2014 = vmatpush.bf16.msra.mxu0 %v1939
        %2015 = vmatpush.bf16.msra.mxu0 %v1935
        %2016 = vmatpush.bf16.msra.mxu0 %v1931
        %2017 = vmatpush.bf16.msra.mxu0 %v1927
        %2018 = vmatpush.bf16.msra.mxu0 %v1923
        %2019 = vmatpush.bf16.msra.mxu0 %v1919
        %2020 = vmatpush.bf16.msra.mxu0 %v1915
        %2021 = vmatpush.bf16.msra.mxu0 %v1911
        %2022 = vmatmul.bf16.gmra.mxu0 %v726
        %v2023 = vpop.f32.mrf.mxu0
        %v2024 = vadd.f32 0.0, %v2023
        %v2025 = vpop.f32.mrf.mxu0
        %v2026 = vadd.f32 0.0, %v2025
        %2027 = vdwg.mxu0
        %v2060 = vunpack.c.l.b16 %v1747
        %v2061 = vunpack.c.h.b16 %v1747
        %v2062 = vunpack.c.l.b16 %v1748
        %v2063 = vunpack.c.h.b16 %v1748
        %v2064 = vunpack.c.l.b16 %v1749
        %v2065 = vunpack.c.h.b16 %v1749
        %v2066 = vunpack.c.l.b16 %v1750
        %v2067 = vunpack.c.h.b16 %v1750
        %v2068 = vunpack.c.l.b16 %v1751
        %v2069 = vunpack.c.h.b16 %v1751
        %v2070 = vunpack.c.l.b16 %v1752
        %v2071 = vunpack.c.h.b16 %v1752
        %v2072 = vunpack.c.l.b16 %v1753
        %v2073 = vunpack.c.h.b16 %v1753
        %v2074 = vunpack.c.l.b16 %v1754
        %v2075 = vunpack.c.h.b16 %v1754
        %v2076 = vunpack.c.l.b16 %v1755
        %v2077 = vunpack.c.h.b16 %v1755
        %v2078 = vunpack.c.l.b16 %v1756
        %v2079 = vunpack.c.h.b16 %v1756
        %v2080 = vunpack.c.l.b16 %v1757
        %v2081 = vunpack.c.h.b16 %v1757
        %v2082 = vunpack.c.l.b16 %v1758
        %v2083 = vunpack.c.h.b16 %v1758
        %v2084 = vunpack.c.l.b16 %v1759
        %v2085 = vunpack.c.h.b16 %v1759
        %v2086 = vunpack.c.l.b16 %v1760
        %v2087 = vunpack.c.h.b16 %v1760
        %v2088 = vunpack.c.l.b16 %v1761
        %v2089 = vunpack.c.h.b16 %v1761
        %v2090 = vunpack.c.l.b16 %v1762
        %v2091 = vunpack.c.h.b16 %v1762
        %v2092 = vunpack.c.l.b16 %v1763
        %v2093 = vunpack.c.h.b16 %v1763
        %v2094 = vunpack.c.l.b16 %v1764
        %v2095 = vunpack.c.h.b16 %v1764
        %v2096 = vunpack.c.l.b16 %v1765
        %v2097 = vunpack.c.h.b16 %v1765
        %v2098 = vunpack.c.l.b16 %v1766
        %v2099 = vunpack.c.h.b16 %v1766
        %v2100 = vunpack.c.l.b16 %v1767
        %v2101 = vunpack.c.h.b16 %v1767
        %v2102 = vunpack.c.l.b16 %v1768
        %v2103 = vunpack.c.h.b16 %v1768
        %v2104 = vunpack.c.l.b16 %v1769
        %v2105 = vunpack.c.h.b16 %v1769
        %v2106 = vunpack.c.l.b16 %v1770
        %v2107 = vunpack.c.h.b16 %v1770
        %v2108 = vunpack.c.l.b16 %v1771
        %v2109 = vunpack.c.h.b16 %v1771
        %v2110 = vunpack.c.l.b16 %v1772
        %v2111 = vunpack.c.h.b16 %v1772
        %v2112 = vunpack.c.l.b16 %v1773
        %v2113 = vunpack.c.h.b16 %v1773
        %v2114 = vunpack.c.l.b16 %v1774
        %v2115 = vunpack.c.h.b16 %v1774
        %v2116 = vunpack.c.l.b16 %v1775
        %v2117 = vunpack.c.h.b16 %v1775
        %v2118 = vunpack.c.l.b16 %v1776
        %v2119 = vunpack.c.h.b16 %v1776
        %v2120 = vunpack.c.l.b16 %v1777
        %v2121 = vunpack.c.h.b16 %v1777
        %v2122 = vunpack.c.l.b16 %v1778
        %v2123 = vunpack.c.h.b16 %v1778
        %v2124 = vpack.c.b16 %v2064, %v2060
        %v2125 = vpack.c.b16 %v2065, %v2061
        %v2126 = vpack.c.b16 %v2066, %v2062
        %v2127 = vpack.c.b16 %v2067, %v2063
        %v2128 = vpack.c.b16 %v2072, %v2068
        %v2129 = vpack.c.b16 %v2073, %v2069
        %v2130 = vpack.c.b16 %v2074, %v2070
        %v2131 = vpack.c.b16 %v2075, %v2071
        %v2132 = vpack.c.b16 %v2080, %v2076
        %v2133 = vpack.c.b16 %v2081, %v2077
        %v2134 = vpack.c.b16 %v2082, %v2078
        %v2135 = vpack.c.b16 %v2083, %v2079
        %v2136 = vpack.c.b16 %v2088, %v2084
        %v2137 = vpack.c.b16 %v2089, %v2085
        %v2138 = vpack.c.b16 %v2090, %v2086
        %v2139 = vpack.c.b16 %v2091, %v2087
        %v2140 = vpack.c.b16 %v2096, %v2092
        %v2141 = vpack.c.b16 %v2097, %v2093
        %v2142 = vpack.c.b16 %v2098, %v2094
        %v2143 = vpack.c.b16 %v2099, %v2095
        %v2144 = vpack.c.b16 %v2104, %v2100
        %v2145 = vpack.c.b16 %v2105, %v2101
        %v2146 = vpack.c.b16 %v2106, %v2102
        %v2147 = vpack.c.b16 %v2107, %v2103
        %v2148 = vpack.c.b16 %v2112, %v2108
        %v2149 = vpack.c.b16 %v2113, %v2109
        %v2150 = vpack.c.b16 %v2114, %v2110
        %v2151 = vpack.c.b16 %v2115, %v2111
        %v2152 = vpack.c.b16 %v2120, %v2116
        %v2153 = vpack.c.b16 %v2121, %v2117
        %v2154 = vpack.c.b16 %v2122, %v2118
        %v2155 = vpack.c.b16 %v2123, %v2119
        %2188 = vmatpush.bf16.msra.mxu0 %v2152
        %2189 = vmatpush.bf16.msra.mxu0 %v2148
        %2190 = vmatpush.bf16.msra.mxu0 %v2144
        %2191 = vmatpush.bf16.msra.mxu0 %v2140
        %2192 = vmatpush.bf16.msra.mxu0 %v2136
        %2193 = vmatpush.bf16.msra.mxu0 %v2132
        %2194 = vmatpush.bf16.msra.mxu0 %v2128
        %2195 = vmatpush.bf16.msra.mxu0 %v2124
        %2196 = vmatmul.bf16.gmra.mxu0 %v1779
        %v2197 = vpop.f32.mrf.mxu0
        %v2198 = vadd.f32 %v1982, %v2197
        %v2199 = vpop.f32.mrf.mxu0
        %v2200 = vadd.f32 %v1984, %v2199
        %2201 = vdwg.mxu0
        %2202 = vmatpush.bf16.msra.mxu0 %v2153
        %2203 = vmatpush.bf16.msra.mxu0 %v2149
        %2204 = vmatpush.bf16.msra.mxu0 %v2145
        %2205 = vmatpush.bf16.msra.mxu0 %v2141
        %2206 = vmatpush.bf16.msra.mxu0 %v2137
        %2207 = vmatpush.bf16.msra.mxu0 %v2133
        %2208 = vmatpush.bf16.msra.mxu0 %v2129
        %2209 = vmatpush.bf16.msra.mxu0 %v2125
        %2210 = vmatmul.bf16.gmra.mxu0 %v1779
        %v2211 = vpop.f32.mrf.mxu0
        %v2212 = vadd.f32 %v1996, %v2211
        %v2213 = vpop.f32.mrf.mxu0
        %v2214 = vadd.f32 %v1998, %v2213
        %2215 = vdwg.mxu0
        %2216 = vmatpush.bf16.msra.mxu0 %v2154
        %2217 = vmatpush.bf16.msra.mxu0 %v2150
        %2218 = vmatpush.bf16.msra.mxu0 %v2146
        %2219 = vmatpush.bf16.msra.mxu0 %v2142
        %2220 = vmatpush.bf16.msra.mxu0 %v2138
        %2221 = vmatpush.bf16.msra.mxu0 %v2134
        %2222 = vmatpush.bf16.msra.mxu0 %v2130
        %2223 = vmatpush.bf16.msra.mxu0 %v2126
        %2224 = vmatmul.bf16.gmra.mxu0 %v1779
        %v2225 = vpop.f32.mrf.mxu0
        %v2226 = vadd.f32 %v2010, %v2225
        %v2227 = vpop.f32.mrf.mxu0
        %v2228 = vadd.f32 %v2012, %v2227
        %2229 = vdwg.mxu0
        %2230 = vmatpush.bf16.msra.mxu0 %v2155
        %2231 = vmatpush.bf16.msra.mxu0 %v2151
        %2232 = vmatpush.bf16.msra.mxu0 %v2147
        %2233 = vmatpush.bf16.msra.mxu0 %v2143
        %2234 = vmatpush.bf16.msra.mxu0 %v2139
        %2235 = vmatpush.bf16.msra.mxu0 %v2135
        %2236 = vmatpush.bf16.msra.mxu0 %v2131
        %2237 = vmatpush.bf16.msra.mxu0 %v2127
        %2238 = vmatmul.bf16.gmra.mxu0 %v1779
        %v2239 = vpop.f32.mrf.mxu0
        %v2240 = vadd.f32 %v2024, %v2239
        %v2241 = vpop.f32.mrf.mxu0
        %v2242 = vadd.f32 %v2026, %v2241
        %2243 = vdwg.mxu0
        %v2244 = vld [vmem:[%s8] sm:$0xf]
        %v2246 = vperm.slane %v2244, 0
        %v2247 = vperm.slane %v2244, 1
        %v2248 = vperm.slane %v2244, 2
        %v2249 = vperm.slane %v2244, 3
        %v2254 = vadd.f32 %v2198, %v2246
        %v2255 = vadd.f32 %v2212, %v2247
        %v2256 = vadd.f32 %v2226, %v2248
        %v2257 = vadd.f32 %v2240, %v2249
        %v2258 = vadd.f32 %v2200, %v2246
        %v2259 = vadd.f32 %v2214, %v2247
        %v2260 = vadd.f32 %v2228, %v2248
        %v2261 = vadd.f32 %v2242, %v2249
        %v2262 = vxor.u32 %v2254, 2147483648
        %v2263 = vxor.u32 %v2258, 2147483648
        %v2264 = vmul.f32 %v2262, 1.442695
        %v2265 = vpow.pop %v2264
        %v2266 = vmul.f32 %v2263, 1.442695
        %v2267 = vpow.pop %v2266
        %v2268 = vadd.f32 %v2265, 1.0
        %v2269 = vadd.f32 %v2267, 1.0
        %v2270 = vrcp.pop %v2268
        %v2271 = vmul.f32 %v2268, %v2270
        %v2272 = vsub.f32 1.0, %v2271
        %v2273 = vmul.f32 %v2270, %v2272
        %v2274 = vadd.f32 %v2270, %v2273
        %vm2275 = vweird.f32 %v2268
        %vm2276 = vweird.f32 %v2270
        %vm2277 = vmor %vm2275, %vm2276
        %v2278 = vsel %vm2277, %v2270, %v2274
        %v2279 = vand.u32 2147483647, %v2268
        %vm2280 = vcmp.eq.f32.partialorder %v2279, 8.507059e+37
        %v2281 = vand.u32 %v2268, 2147483648
        %v2282 = vor.u32 1.1754944e-38, %v2281
        %v2283 = vsel %vm2280, %v2282, %v2278
        %v2284 = vmul.f32 1.0, %v2283
        %v2285 = vrcp.pop %v2269
        %v2286 = vmul.f32 %v2269, %v2285
        %v2287 = vsub.f32 1.0, %v2286
        %v2288 = vmul.f32 %v2285, %v2287
        %v2289 = vadd.f32 %v2285, %v2288
        %vm2290 = vweird.f32 %v2269
        %vm2291 = vweird.f32 %v2285
        %vm2292 = vmor %vm2290, %vm2291
        %v2293 = vsel %vm2292, %v2285, %v2289
        %v2294 = vand.u32 2147483647, %v2269
        %vm2295 = vcmp.eq.f32.partialorder %v2294, 8.507059e+37
        %v2296 = vand.u32 %v2269, 2147483648
        %v2297 = vor.u32 1.1754944e-38, %v2296
        %v2298 = vsel %vm2295, %v2297, %v2293
        %v2299 = vmul.f32 1.0, %v2298
        %v2300 = vxor.u32 %v2255, 2147483648
        %v2301 = vxor.u32 %v2259, 2147483648
        %v2302 = vmul.f32 %v2300, 1.442695
        %v2303 = vpow.pop %v2302
        %v2304 = vmul.f32 %v2301, 1.442695
        %v2305 = vpow.pop %v2304
        %v2306 = vadd.f32 %v2303, 1.0
        %v2307 = vadd.f32 %v2305, 1.0
        %v2308 = vrcp.pop %v2306
        %v2309 = vmul.f32 %v2306, %v2308
        %v2310 = vsub.f32 1.0, %v2309
        %v2311 = vmul.f32 %v2308, %v2310
        %v2312 = vadd.f32 %v2308, %v2311
        %vm2313 = vweird.f32 %v2306
        %vm2314 = vweird.f32 %v2308
        %vm2315 = vmor %vm2313, %vm2314
        %v2316 = vsel %vm2315, %v2308, %v2312
        %v2317 = vand.u32 2147483647, %v2306
        %vm2318 = vcmp.eq.f32.partialorder %v2317, 8.507059e+37
        %v2319 = vand.u32 %v2306, 2147483648
        %v2320 = vor.u32 1.1754944e-38, %v2319
        %v2321 = vsel %vm2318, %v2320, %v2316
        %v2322 = vmul.f32 1.0, %v2321
        %v2323 = vrcp.pop %v2307
        %v2324 = vmul.f32 %v2307, %v2323
        %v2325 = vsub.f32 1.0, %v2324
        %v2326 = vmul.f32 %v2323, %v2325
        %v2327 = vadd.f32 %v2323, %v2326
        %vm2328 = vweird.f32 %v2307
        %vm2329 = vweird.f32 %v2323
        %vm2330 = vmor %vm2328, %vm2329
        %v2331 = vsel %vm2330, %v2323, %v2327
        %v2332 = vand.u32 2147483647, %v2307
        %vm2333 = vcmp.eq.f32.partialorder %v2332, 8.507059e+37
        %v2334 = vand.u32 %v2307, 2147483648
        %v2335 = vor.u32 1.1754944e-38, %v2334
        %v2336 = vsel %vm2333, %v2335, %v2331
        %v2337 = vmul.f32 1.0, %v2336
        %v2338 = vtanh.pop %v2256
        %v2339 = vtanh.pop %v2260
        %v2340 = vxor.u32 %v2257, 2147483648
        %v2341 = vxor.u32 %v2261, 2147483648
        %v2342 = vmul.f32 %v2340, 1.442695
        %v2343 = vpow.pop %v2342
        %v2344 = vmul.f32 %v2341, 1.442695
        %v2345 = vpow.pop %v2344
        %v2346 = vadd.f32 %v2343, 1.0
        %v2347 = vadd.f32 %v2345, 1.0
        %v2348 = vrcp.pop %v2346
        %v2349 = vmul.f32 %v2346, %v2348
        %v2350 = vsub.f32 1.0, %v2349
        %v2351 = vmul.f32 %v2348, %v2350
        %v2352 = vadd.f32 %v2348, %v2351
        %vm2353 = vweird.f32 %v2346
        %vm2354 = vweird.f32 %v2348
        %vm2355 = vmor %vm2353, %vm2354
        %v2356 = vsel %vm2355, %v2348, %v2352
        %v2357 = vand.u32 2147483647, %v2346
        %vm2358 = vcmp.eq.f32.partialorder %v2357, 8.507059e+37
        %v2359 = vand.u32 %v2346, 2147483648
        %v2360 = vor.u32 1.1754944e-38, %v2359
        %v2361 = vsel %vm2358, %v2360, %v2356
        %v2362 = vmul.f32 1.0, %v2361
        %v2363 = vrcp.pop %v2347
        %v2364 = vmul.f32 %v2347, %v2363
        %v2365 = vsub.f32 1.0, %v2364
        %v2366 = vmul.f32 %v2363, %v2365
        %v2367 = vadd.f32 %v2363, %v2366
        %vm2368 = vweird.f32 %v2347
        %vm2369 = vweird.f32 %v2363
        %vm2370 = vmor %vm2368, %vm2369
        %v2371 = vsel %vm2370, %v2363, %v2367
        %v2372 = vand.u32 2147483647, %v2347
        %vm2373 = vcmp.eq.f32.partialorder %v2372, 8.507059e+37
        %v2374 = vand.u32 %v2347, 2147483648
        %v2375 = vor.u32 1.1754944e-38, %v2374
        %v2376 = vsel %vm2373, %v2375, %v2371
        %v2377 = vmul.f32 1.0, %v2376
        %v2378 = vmul.f32 %v2322, %v707
        %v2379 = vmul.f32 %v2337, %v708
        %v2380 = vmul.f32 %v2284, %v2338
        %v2381 = vmul.f32 %v2299, %v2339
        %v2382 = vadd.f32 %v2378, %v2380
        %v2383 = vadd.f32 %v2379, %v2381
        %v2384 = vtanh.pop %v2382
        %v2385 = vtanh.pop %v2383
        %v2386 = vmul.f32 %v2362, %v2384
        %v2387 = vmul.f32 %v2377, %v2385
        %2388 = vst [vmem:[#allocation3] sm:$0xff] %v2386
        %2389 = vst [vmem:[#allocation3 + $0x8] sm:$0xff] %v2387
        %2390 = vst [vmem:[#allocation4] sm:$0xff] %v2382
        %2391 = vst [vmem:[#allocation4 + $0x8] sm:$0xff] %v2383
        %s2392 = scalar_lea.vmem [#allocation5], 704
        %v2393 = vld [vmem:[%s2392] sm:$0xf]
        %v2394 = vld [vmem:[%s2392 + $0x4] sm:$0xf]
        %v2395 = vld [vmem:[%s2392 + $0x8] sm:$0xf]
        %v2396 = vld [vmem:[%s2392 + $0xc] sm:$0xf]
        %v2397 = vld [vmem:[%s2392 + $0x10] sm:$0xf]
        %v2398 = vld [vmem:[%s2392 + $0x14] sm:$0xf]
        %v2399 = vld [vmem:[%s2392 + $0x18] sm:$0xf]
        %v2400 = vld [vmem:[%s2392 + $0x1c] sm:$0xf]
        %v2401 = vld [vmem:[%s2392 + $0x20] sm:$0xf]
        %v2402 = vld [vmem:[%s2392 + $0x24] sm:$0xf]
        %v2403 = vld [vmem:[%s2392 + $0x28] sm:$0xf]
        %v2404 = vld [vmem:[%s2392 + $0x2c] sm:$0xf]
        %v2405 = vld [vmem:[%s2392 + $0x30] sm:$0xf]
        %v2406 = vld [vmem:[%s2392 + $0x34] sm:$0xf]
        %v2407 = vld [vmem:[%s2392 + $0x38] sm:$0xf]
        %v2408 = vld [vmem:[%s2392 + $0x3c] sm:$0xf]
        %v2409 = vpack.c.bf16 %v2387, %v2386
        %s2410 = scalar_lea.vmem %s5, 9
        %v2411 = vld [vmem:[%s2410] sm:$0x1]
        %v2413 = vperm.slane %v2411, 0
        %v2431 = vunpack.c.l.b16 %v2393
        %v2432 = vunpack.c.l.b16 %v2394
        %v2433 = vunpack.c.l.b16 %v2395
        %v2434 = vunpack.c.l.b16 %v2396
        %v2435 = vunpack.c.l.b16 %v2397
        %v2436 = vunpack.c.l.b16 %v2398
        %v2437 = vunpack.c.l.b16 %v2399
        %v2438 = vunpack.c.l.b16 %v2400
        %v2439 = vunpack.c.l.b16 %v2401
        %v2440 = vunpack.c.l.b16 %v2402
        %v2441 = vunpack.c.l.b16 %v2403
        %v2442 = vunpack.c.l.b16 %v2404
        %v2443 = vunpack.c.l.b16 %v2405
        %v2444 = vunpack.c.l.b16 %v2406
        %v2445 = vunpack.c.l.b16 %v2407
        %v2446 = vunpack.c.l.b16 %v2408
        %v2447 = vpack.c.b16 %v2432, %v2431
        %v2448 = vpack.c.b16 %v2434, %v2433
        %v2449 = vpack.c.b16 %v2436, %v2435
        %v2450 = vpack.c.b16 %v2438, %v2437
        %v2451 = vpack.c.b16 %v2440, %v2439
        %v2452 = vpack.c.b16 %v2442, %v2441
        %v2453 = vpack.c.b16 %v2444, %v2443
        %v2454 = vpack.c.b16 %v2446, %v2445
        %2463 = vmatpush.bf16.msra.mxu0 %v2454
        %2464 = vmatpush.bf16.msra.mxu0 %v2453
        %2465 = vmatpush.bf16.msra.mxu0 %v2452
        %2466 = vmatpush.bf16.msra.mxu0 %v2451
        %2467 = vmatpush.bf16.msra.mxu0 %v2450
        %2468 = vmatpush.bf16.msra.mxu0 %v2449
        %2469 = vmatpush.bf16.msra.mxu0 %v2448
        %2470 = vmatpush.bf16.msra.mxu0 %v2447
        %2471 = vmatmul.bf16.gmra.mxu0 %v2409
        %v2472 = vpop.f32.mrf.mxu0
        %v2473 = vadd.f32 %v2413, %v2472
        %v2474 = vpop.f32.mrf.mxu0
        %v2475 = vadd.f32 %v2413, %v2474
        %2476 = vdwg.mxu0
        %v2477 = vmax.f32 %v2473, 0.0
        %v2478 = vmax.f32 %v2475, 0.0
        %s2479 = scalar_lea.vmem [#allocation5], 768
        %v2480 = vld [vmem:[%s2479] sm:$0xf]
        %v2481 = vld [vmem:[%s2479 + $0x4] sm:$0xf]
        %v2482 = vld [vmem:[%s2479 + $0x8] sm:$0xf]
        %v2483 = vld [vmem:[%s2479 + $0xc] sm:$0xf]
        %v2484 = vld [vmem:[%s2479 + $0x10] sm:$0xf]
        %v2485 = vld [vmem:[%s2479 + $0x14] sm:$0xf]
        %v2486 = vld [vmem:[%s2479 + $0x18] sm:$0xf]
        %v2487 = vld [vmem:[%s2479 + $0x1c] sm:$0xf]
        %v2488 = vld [vmem:[%s2479 + $0x20] sm:$0xf]
        %v2489 = vld [vmem:[%s2479 + $0x24] sm:$0xf]
        %v2490 = vld [vmem:[%s2479 + $0x28] sm:$0xf]
        %v2491 = vld [vmem:[%s2479 + $0x2c] sm:$0xf]
        %v2492 = vld [vmem:[%s2479 + $0x30] sm:$0xf]
        %v2493 = vld [vmem:[%s2479 + $0x34] sm:$0xf]
        %v2494 = vld [vmem:[%s2479 + $0x38] sm:$0xf]
        %v2495 = vld [vmem:[%s2479 + $0x3c] sm:$0xf]
        %v2496 = vpack.c.bf16 %v2478, %v2477
        %s2497 = scalar_lea.vmem %s5, 10
        %v2498 = vld [vmem:[%s2497] sm:$0x1]
        %v2500 = vperm.slane %v2498, 0
        %v2518 = vunpack.c.l.b16 %v2480
        %v2519 = vunpack.c.l.b16 %v2481
        %v2520 = vunpack.c.l.b16 %v2482
        %v2521 = vunpack.c.l.b16 %v2483
        %v2522 = vunpack.c.l.b16 %v2484
        %v2523 = vunpack.c.l.b16 %v2485
        %v2524 = vunpack.c.l.b16 %v2486
        %v2525 = vunpack.c.l.b16 %v2487
        %v2526 = vunpack.c.l.b16 %v2488
        %v2527 = vunpack.c.l.b16 %v2489
        %v2528 = vunpack.c.l.b16 %v2490
        %v2529 = vunpack.c.l.b16 %v2491
        %v2530 = vunpack.c.l.b16 %v2492
        %v2531 = vunpack.c.l.b16 %v2493
        %v2532 = vunpack.c.l.b16 %v2494
        %v2533 = vunpack.c.l.b16 %v2495
        %v2534 = vpack.c.b16 %v2519, %v2518
        %v2535 = vpack.c.b16 %v2521, %v2520
        %v2536 = vpack.c.b16 %v2523, %v2522
        %v2537 = vpack.c.b16 %v2525, %v2524
        %v2538 = vpack.c.b16 %v2527, %v2526
        %v2539 = vpack.c.b16 %v2529, %v2528
        %v2540 = vpack.c.b16 %v2531, %v2530
        %v2541 = vpack.c.b16 %v2533, %v2532
        %2550 = vmatpush.bf16.msra.mxu0 %v2541
        %2551 = vmatpush.bf16.msra.mxu0 %v2540
        %2552 = vmatpush.bf16.msra.mxu0 %v2539
        %2553 = vmatpush.bf16.msra.mxu0 %v2538
        %2554 = vmatpush.bf16.msra.mxu0 %v2537
        %2555 = vmatpush.bf16.msra.mxu0 %v2536
        %2556 = vmatpush.bf16.msra.mxu0 %v2535
        %2557 = vmatpush.bf16.msra.mxu0 %v2534
        %2558 = vmatmul.bf16.gmra.mxu0 %v2496
        %v2559 = vpop.f32.mrf.mxu0
        %v2560 = vadd.f32 %v2500, %v2559
        %v2561 = vpop.f32.mrf.mxu0
        %v2562 = vadd.f32 %v2500, %v2561
        %2563 = vdwg.mxu0
        %v2564 = vmax.f32 %v2560, 0.0
        %v2565 = vmax.f32 %v2562, 0.0
        %s2566 = scalar_lea.vmem [#allocation5], 832
        %v2567 = vld [vmem:[%s2566] sm:$0xf]
        %v2568 = vld [vmem:[%s2566 + $0x4] sm:$0xf]
        %v2569 = vld [vmem:[%s2566 + $0x8] sm:$0xf]
        %v2570 = vld [vmem:[%s2566 + $0xc] sm:$0xf]
        %v2571 = vld [vmem:[%s2566 + $0x10] sm:$0xf]
        %v2572 = vld [vmem:[%s2566 + $0x14] sm:$0xf]
        %v2573 = vld [vmem:[%s2566 + $0x18] sm:$0xf]
        %v2574 = vld [vmem:[%s2566 + $0x1c] sm:$0xf]
        %v2575 = vld [vmem:[%s2566 + $0x20] sm:$0xf]
        %v2576 = vld [vmem:[%s2566 + $0x24] sm:$0xf]
        %v2577 = vld [vmem:[%s2566 + $0x28] sm:$0xf]
        %v2578 = vld [vmem:[%s2566 + $0x2c] sm:$0xf]
        %v2579 = vld [vmem:[%s2566 + $0x30] sm:$0xf]
        %v2580 = vld [vmem:[%s2566 + $0x34] sm:$0xf]
        %v2581 = vld [vmem:[%s2566 + $0x38] sm:$0xf]
        %v2582 = vld [vmem:[%s2566 + $0x3c] sm:$0xf]
        %v2583 = vpack.c.bf16 %v2565, %v2564
        %s2584 = scalar_lea.vmem %s5, 11
        %v2585 = vld [vmem:[%s2584] sm:$0x1]
        %v2587 = vperm.slane %v2585, 0
        %v2605 = vunpack.c.l.b16 %v2567
        %v2606 = vunpack.c.l.b16 %v2568
        %v2607 = vunpack.c.l.b16 %v2569
        %v2608 = vunpack.c.l.b16 %v2570
        %v2609 = vunpack.c.l.b16 %v2571
        %v2610 = vunpack.c.l.b16 %v2572
        %v2611 = vunpack.c.l.b16 %v2573
        %v2612 = vunpack.c.l.b16 %v2574
        %v2613 = vunpack.c.l.b16 %v2575
        %v2614 = vunpack.c.l.b16 %v2576
        %v2615 = vunpack.c.l.b16 %v2577
        %v2616 = vunpack.c.l.b16 %v2578
        %v2617 = vunpack.c.l.b16 %v2579
        %v2618 = vunpack.c.l.b16 %v2580
        %v2619 = vunpack.c.l.b16 %v2581
        %v2620 = vunpack.c.l.b16 %v2582
        %v2621 = vpack.c.b16 %v2606, %v2605
        %v2622 = vpack.c.b16 %v2608, %v2607
        %v2623 = vpack.c.b16 %v2610, %v2609
        %v2624 = vpack.c.b16 %v2612, %v2611
        %v2625 = vpack.c.b16 %v2614, %v2613
        %v2626 = vpack.c.b16 %v2616, %v2615
        %v2627 = vpack.c.b16 %v2618, %v2617
        %v2628 = vpack.c.b16 %v2620, %v2619
        %2637 = vmatpush.bf16.msra.mxu0 %v2628
        %2638 = vmatpush.bf16.msra.mxu0 %v2627
        %2639 = vmatpush.bf16.msra.mxu0 %v2626
        %2640 = vmatpush.bf16.msra.mxu0 %v2625
        %2641 = vmatpush.bf16.msra.mxu0 %v2624
        %2642 = vmatpush.bf16.msra.mxu0 %v2623
        %2643 = vmatpush.bf16.msra.mxu0 %v2622
        %2644 = vmatpush.bf16.msra.mxu0 %v2621
        %2645 = vmatmul.bf16.gmra.mxu0 %v2583
        %v2646 = vpop.f32.mrf.mxu0
        %v2647 = vadd.f32 %v2587, %v2646
        %v2648 = vpop.f32.mrf.mxu0
        %v2649 = vadd.f32 %v2587, %v2648
        %2650 = vdwg.mxu0
        %2651 = vst [vmem:[%s417] sm:$0xff] %v2647
        %2652 = vst [vmem:[%s417 + $0x8] sm:$0xff] %v2649
        %s2653 = sand.u32 %s268, 1
        %s2654 = scalar_lea.sflag [#allocation7], %s2653
        %s2655 = sand.u32 %s268, 1
        %s2656 = smul.addr %s2655, 16
        %s2657 = scalar_lea.vmem [#allocation10], %s2656
        // Predicated region
        $region73: #{embed_rrn_forward.1} parent=59 // pred_check
          %p2658 = pneg %p278
        $region74: #{embed_rrn_forward.1} parent=59 // pred_check_branch
          %2660 = sbr.rel (%p2658) target = $region76
        $region75: #{embed_rrn_forward.1} parent=59 // pred_region
          %s2661 = smul.u32 2, %s30
          %2663 = vsyncadd %s2654, 0
          %s2664 = smul.addr %s31, 4
          %s2665 = sadd.s32 %s2661, %s2664
          %s2666 = smul.addr %s2665, 8
          %s2667 = scalar_lea.hbm %s10, %s2666
          %s2668 = sshll.u32 %s2657, 4
          %s2669 = int_to_ptr.vmem [resolvable:$true] %s2668
          %s2670 = sshll.u32 %s2667, 4
          %s2671 = int_to_ptr.hbm [resolvable:$true] %s2670
          %2676 = dma.vmem_to_hbm [thread:$0]  %s2669, 256, %s2671, %s2654, 128, 128, 8
        $region76: #{embed_rrn_forward.1} parent=59 // pred_fallthru
          _
      $region60: #{embed_rrn_forward.1} parent=5 // pred_fallthru
        _
      %p2677 = scmp.le.s32.totalorder 2, %s21
      // Predicated region
      $region77: #{embed_rrn_forward.1} parent=5 // pred_check
        %p2678 = pneg %p2677
      $region78: #{embed_rrn_forward.1} parent=5 // pred_check_branch
        %2680 = sbr.rel (%p2678) target = $region80
      $region79: #{embed_rrn_forward.1} parent=5 // pred_region
        %s2681 = ssub.s32 %s21, 2
        // Predicated region
        $region81: #{embed_rrn_forward.1} parent=79 // pred_check
          %p2682 = pneg %p284
        $region82: #{embed_rrn_forward.1} parent=79 // pred_check_branch
          %2684 = sbr.rel (%p2682) target = $region84
        $region83: #{embed_rrn_forward.1} parent=79 // pred_region
          %s2685 = sand.u32 %s269, 1
          %s2686 = scalar_lea.sflag [#allocation7], %s2685
          %s2687 = sand.u32 %s269, 1
          %s2688 = smul.addr %s2687, 16
          %s2689 = scalar_lea.vmem [#allocation10], %s2688
          %2691 = dma.done %s2686, 256
        $region84: #{embed_rrn_forward.1} parent=79 // pred_fallthru
          _
      $region80: #{embed_rrn_forward.1} parent=5 // pred_fallthru
        _
    $region6: #{embed_rrn_forward.1} parent=1 // loop_footer
      %s25 = sadd.s32 1, %s21
    $region7: #{embed_rrn_forward.1} parent=1 // loop_footer_branch
      %20 = sbr.rel target = $region3
    $region8: #{embed_rrn_forward.1} parent=1 // loop_exit
      _
    %2692 = vsyncpa [#allocation6], 1
    %s2693 = scalar_lea.sflag [#allocation6], 1
    %2694 = vsyncpa %s2693, 1
    %2695 = vsyncpa [#allocation9], 1
    %2696 = vsyncpa [#allocation7], 1
    %s2697 = scalar_lea.sflag [#allocation7], 1
    %2698 = vsyncpa %s2697, 1

</llo_original>
